<compile_context>
chip_gen: v7x
topology: tpu7x:2x2x1
jax: 0.10.0
libtpu: 0.0.40
codegen_flags: <defaults>
</compile_context>

<pallas_src>
import jax
import jax.numpy as jnp
from jax import lax
from jax.experimental import pallas as pl
from jax.experimental.pallas import tpu as pltpu


# ---------------------------------------------------------------------------
# Small in-kernel relayout helpers (lane <-> sublane) built only from
# broadcast / iota / where / reductions, which always lower on Mosaic.
# Sizes here are tiny (TILE <= Cout), pure VPU/XLU slack filler.
# ---------------------------------------------------------------------------
def _lanes_to_sublanes(row, n):
    """(1, n) row vector -> (n, 1) column vector."""
    sel = (lax.broadcasted_iota(jnp.int32, (n, n), 0)
           == lax.broadcasted_iota(jnp.int32, (n, n), 1))
    return jnp.sum(jnp.where(sel, jnp.broadcast_to(row, (n, n)), 0.0),
                   axis=1, keepdims=True)


def _sublanes_to_lanes(col, n):
    """(n, 1) column vector -> (1, n) row vector."""
    sel = (lax.broadcasted_iota(jnp.int32, (n, n), 0)
           == lax.broadcasted_iota(jnp.int32, (n, n), 1))
    return jnp.sum(jnp.where(sel, jnp.broadcast_to(col, (n, n)), 0.0),
                   axis=0, keepdims=True)


# ---------------------------------------------------------------------------
# Kernel
# ---------------------------------------------------------------------------
def fused_kernel(x_ref, w_ref, gb_ref, o_ref, stats_ref):
    tile = o_ref.shape[0]
    m = o_ref.shape[1]

    # relu72 on the conv input. x is the resident full-[C, M] block; the ReLU
    # is recomputed per Cout tile -- cheaper (pure VPU slack) than an extra
    # scratch buffer plus ordering.
    x = jnp.maximum(x_ref[...], 0.0)

    # conv2d94: 1x1 conv, stride 1, no bias == [TILE, C] @ [C, M] on the MXU.
    y = jnp.dot(w_ref[...], x, preferred_element_type=jnp.float32)

    # batchnorm2d58 (training mode): per-channel batch stats over M = N*H*W,
    # biased variance, eps = 1e-5.  Centered two-pass variance (y is in VMEM).
    inv_m = 1.0 / m                                   # true element count
    mean = jnp.sum(y, axis=1, keepdims=True) * inv_m  # [TILE, 1]
    centered = y - mean
    var = jnp.sum(centered * centered, axis=1, keepdims=True) * inv_m

    # gamma/beta arrive as two contiguous lane-major rows; move to per-channel
    # column vectors for broadcasting against y's [TILE, M] rows.
    gb = gb_ref[0]                                    # (2, TILE)
    gamma = _lanes_to_sublanes(gb[0:1, :], tile)      # [TILE, 1]
    beta = _lanes_to_sublanes(gb[1:2, :], tile)       # [TILE, 1]

    scale = lax.rsqrt(var + 1e-5) * gamma             # [TILE, 1]
    shift = beta - mean * scale                       # [TILE, 1]

    # relu73
    o_ref[...] = jnp.maximum(y * scale + shift, 0.0).astype(o_ref.dtype)

    # Batch statistics out (mean, biased var) so the caller can update the
    # BatchNorm running stats (PyTorch side-effect of training mode).
    stats_ref[0] = jnp.concatenate(
        [_sublanes_to_lanes(mean, tile), _sublanes_to_lanes(var, tile)],
        axis=0)


# ---------------------------------------------------------------------------
# Wrapper / parameter prep
# ---------------------------------------------------------------------------
def _pick_cout_tiling(cout, max_tiles=4):
    """Largest tile count <= max_tiles whose tile is a multiple of 8."""
    for g in range(max_tiles, 1, -1):
        if cout % g == 0 and (cout // g) % 8 == 0:
            return g, cout // g
    return 1, cout


def prepare_params(w_oihw, gamma, beta, num_cout_tiles):
    """One-time (param-load-time) prep: keep it out of the per-call hot path."""
    cout, cin = w_oihw.shape[0], w_oihw.shape[1]
    tile = cout // num_cout_tiles
    w2d = w_oihw.reshape(cout, cin)                       # contiguous, no copy
    gb = jnp.stack([gamma, beta], axis=0)                 # (2, Cout)
    gb = gb.reshape(2, num_cout_tiles, tile)              # split Cout into tiles
    gb = jnp.transpose(gb, (1, 0, 2))                     # (G, 2, TILE), ~3 KB
    return w2d, gb


def relu_conv_bn_relu(x_nchw, w2d, gb, *, return_batch_stats=False):
    n, c, h, w = x_nchw.shape
    cout = w2d.shape[0]
    g, _, tile = gb.shape
    assert g * tile == cout
    m = n * h * w

    if n == 1:
        # NCHW with N == 1 is channel-major: contiguous view, no copy.
        x2d = x_nchw.reshape(c, m)
    else:
        # TODO(synk): transpose-free batched path (grid over N with
        # accumulate-then-finalize BN stats) to kill this HBM round trip.
        x2d = jnp.transpose(x_nchw, (1, 0, 2, 3)).reshape(c, m)

    cost = pl.CostEstimate(
        flops=2 * cout * c * m,
        transcendentals=cout,
        bytes_accessed=4 * (c * m + cout * c + cout * m + 4 * cout),
    )

    out2d, stats = pl.pallas_call(
        fused_kernel,
        out_shape=(
            jax.ShapeDtypeStruct((cout, m), x_nchw.dtype),
            jax.ShapeDtypeStruct((g, 2, tile), jnp.float32),
        ),
        grid_spec=pl.GridSpec(
            grid=(g,),
            in_specs=[
                # x: constant index_map -> fetched once, resident across tiles.
                pl.BlockSpec((c, m), lambda i: (0, 0)),
                pl.BlockSpec((tile, c), lambda i: (i, 0)),
                pl.BlockSpec((1, 2, tile), lambda i: (i, 0, 0)),
            ],
            out_specs=[
                pl.BlockSpec((tile, m), lambda i: (i, 0)),
                pl.BlockSpec((1, 2, tile), lambda i: (i, 0, 0)),
            ],
        ),
        compiler_params=pltpu.CompilerParams(
            dimension_semantics=("parallel",),
        ),
        cost_estimate=cost,
    )(x2d, w2d, gb)

    if n == 1:
        out = out2d.reshape(n, cout, h, w)
    else:
        out = jnp.transpose(out2d.reshape(cout, n, h, w), (1, 0, 2, 3))

    if return_batch_stats:
        # (G, 2, TILE) -> (2, Cout); row 0 = batch mean, row 1 = biased var.
        # PyTorch's running_var update uses the unbiased var: var * m/(m-1).
        s = jnp.transpose(stats, (1, 0, 2)).reshape(2, cout)
        return out, s[0], s[1]
    return out


# ---------------------------------------------------------------------------
# Self-contained check
# ---------------------------------------------------------------------------
def _reference(x, w_oihw, gamma, beta, eps=1e-5):
    xr = jnp.maximum(x, 0.0)
    y = lax.conv_general_dilated(
        xr, w_oihw, window_strides=(1, 1), padding="VALID",
        dimension_numbers=("NCHW", "OIHW", "NCHW"),
        precision=lax.Precision.HIGHEST)
    mean = jnp.mean(y, axis=(0, 2, 3), keepdims=True)
    var = jnp.mean((y - mean) ** 2, axis=(0, 2, 3), keepdims=True)
    yn = (y - mean) * lax.rsqrt(var + eps)
    yn = yn * gamma.reshape(1, -1, 1, 1) + beta.reshape(1, -1, 1, 1)
    return jnp.maximum(yn, 0.0)


if __name__ == "__main__":
    # Shapes implied by the module: x = [1, 336, 14, 14], conv 336 -> 336 (1x1).
    N, C, H, W = 1, 336, 14, 14
    Cout = 336

    key = jax.random.PRNGKey(0)
    k_x, k_w, k_g, k_b = jax.random.split(key, 4)

    x = jax.random.normal(k_x, (N, C, H, W), dtype=jnp.float32)

    # PyTorch-style Conv2d weight init: uniform(-b, b), b = 1/sqrt(fan_in).
    fan_in = C * 1 * 1
    bound = 1.0 / (fan_in ** 0.5)
    w = jax.random.uniform(k_w, (Cout, C, 1, 1), dtype=jnp.float32,
                           minval=-bound, maxval=bound)

    # Non-trivial affine params (exercise the gamma/beta plumbing).
    gamma = 1.0 + 0.5 * jax.random.normal(k_g, (Cout,), dtype=jnp.float32)
    beta = 0.1 * jax.random.normal(k_b, (Cout,), dtype=jnp.float32)

    G, TILE = _pick_cout_tiling(Cout)
    w2d, gb = prepare_params(w, gamma, beta, G)   # one-time, outside hot path

    fused = jax.jit(relu_conv_bn_relu, static_argnames=("return_batch_stats",))
    out = fused(x, w2d, gb)
    jax.block_until_ready(out)
    assert out.shape == (N, Cout, H, W)

    ref = _reference(x, w, gamma, beta)
    max_err = float(jnp.max(jnp.abs(out - ref)))
    assert max_err < 1e-2, f"max abs error vs reference: {max_err}"

    print("KERNEL_OK")
</pallas_src>

<mosaic_0001>
module attributes {stable_mosaic.version = 11 : i64} {
  func.func @fused_kernel(%arg0: i32, %arg1: memref<336x196xf32, #tpu.memory_space<vmem>>, %arg2: memref<112x336xf32, #tpu.memory_space<vmem>>, %arg3: memref<1x2x112xf32, #tpu.memory_space<vmem>>, %arg4: memref<112x196xf32, #tpu.memory_space<vmem>>, %arg5: memref<1x2x112xf32, #tpu.memory_space<vmem>>) attributes {dimension_semantics = [#tpu.dimension_semantics<parallel>], iteration_bounds = array<i64: 3>, scalar_prefetch = 0 : i64, scratch_operands = 0 : i64, tpu.core_type = #tpu.core_type<tc>, window_params = [{pipeline_mode = #tpu.pipeline_mode<synchronous>, transform_indices = @transform_0, window_bounds = array<i64: 336, 196>}, {transform_indices = @transform_1, window_bounds = array<i64: 112, 336>}, {transform_indices = @transform_2, window_bounds = array<i64: 1, 2, 112>}, {transform_indices = @transform_3, window_bounds = array<i64: 112, 196>}, {transform_indices = @transform_4, window_bounds = array<i64: 1, 2, 112>}]} {
    %c0 = arith.constant 0 : index
    %c0_0 = arith.constant 0 : index
    %0 = vector.load %arg1[%c0, %c0_0] : memref<336x196xf32, #tpu.memory_space<vmem>>, vector<336x196xf32>
    %cst = arith.constant 0.000000e+00 : f32
    %1 = vector.broadcast %cst : f32 to vector<336x196xf32>
    %2 = arith.maximumf %0, %1 : vector<336x196xf32>
    %c0_1 = arith.constant 0 : index
    %c0_2 = arith.constant 0 : index
    %3 = vector.load %arg2[%c0_1, %c0_2] : memref<112x336xf32, #tpu.memory_space<vmem>>, vector<112x336xf32>
    %cst_3 = arith.constant dense<0.000000e+00> : vector<112x196xf32>
    %4 = tpu.matmul %3, %2, %cst_3 {dimension_numbers = #tpu.dot_dimension_numbers<[1], [0], [0], [1], [0, 0, 1, 1], [], []>} : vector<112x336xf32>, vector<336x196xf32>, vector<112x196xf32> -> vector<112x196xf32>
    %cst_4 = arith.constant dense<0.000000e+00> : vector<112xf32>
    %5 = vector.multi_reduction <add>, %4, %cst_4 [1] : vector<112x196xf32> to vector<112xf32>
    %6 = vector.shape_cast %5 : vector<112xf32> to vector<112x1xf32>
    %cst_5 = arith.constant 0.00510204071 : f32
    %7 = vector.broadcast %cst_5 : f32 to vector<112x1xf32>
    %8 = arith.mulf %6, %7 : vector<112x1xf32>
    %9 = vector.broadcast %8 : vector<112x1xf32> to vector<112x196xf32>
    %10 = arith.subf %4, %9 : vector<112x196xf32>
    %11 = arith.mulf %10, %10 : vector<112x196xf32>
    %cst_6 = arith.constant dense<0.000000e+00> : vector<112xf32>
    %12 = vector.multi_reduction <add>, %11, %cst_6 [1] : vector<112x196xf32> to vector<112xf32>
    %13 = vector.shape_cast %12 : vector<112xf32> to vector<112x1xf32>
    %cst_7 = arith.constant 0.00510204071 : f32
    %14 = vector.broadcast %cst_7 : f32 to vector<112x1xf32>
    %15 = arith.mulf %13, %14 : vector<112x1xf32>
    %c0_8 = arith.constant 0 : index
    %c0_9 = arith.constant 0 : index
    %c0_10 = arith.constant 0 : index
    %16 = vector.load %arg3[%c0_8, %c0_9, %c0_10] : memref<1x2x112xf32, #tpu.memory_space<vmem>>, vector<1x2x112xf32>
    %17 = vector.shape_cast %16 : vector<1x2x112xf32> to vector<2x112xf32>
    %18 = vector.extract_strided_slice %17 {offsets = [0, 0], sizes = [1, 112], strides = [1, 1]} : vector<2x112xf32> to vector<1x112xf32>
    %19 = tpu.iota {dimensions = array<i32: 0>} : vector<112x112xi32>
    %20 = tpu.iota {dimensions = array<i32: 1>} : vector<112x112xi32>
    %21 = arith.cmpi eq, %19, %20 : vector<112x112xi32>
    %22 = vector.shape_cast %18 : vector<1x112xf32> to vector<1x112xf32>
    %23 = vector.broadcast %22 : vector<1x112xf32> to vector<112x112xf32>
    %cst_11 = arith.constant 0.000000e+00 : f32
    %24 = vector.broadcast %cst_11 : f32 to vector<112x112xf32>
    %25 = arith.select %21, %23, %24 : vector<112x112xi1>, vector<112x112xf32>
    %cst_12 = arith.constant dense<0.000000e+00> : vector<112xf32>
    %26 = vector.multi_reduction <add>, %25, %cst_12 [1] : vector<112x112xf32> to vector<112xf32>
    %27 = vector.shape_cast %26 : vector<112xf32> to vector<112x1xf32>
    %28 = vector.extract_strided_slice %17 {offsets = [1, 0], sizes = [1, 112], strides = [1, 1]} : vector<2x112xf32> to vector<1x112xf32>
    %29 = tpu.iota {dimensions = array<i32: 0>} : vector<112x112xi32>
    %30 = tpu.iota {dimensions = array<i32: 1>} : vector<112x112xi32>
    %31 = arith.cmpi eq, %29, %30 : vector<112x112xi32>
    %32 = vector.shape_cast %28 : vector<1x112xf32> to vector<1x112xf32>
    %33 = vector.broadcast %32 : vector<1x112xf32> to vector<112x112xf32>
    %cst_13 = arith.constant 0.000000e+00 : f32
    %34 = vector.broadcast %cst_13 : f32 to vector<112x112xf32>
    %35 = arith.select %31, %33, %34 : vector<112x112xi1>, vector<112x112xf32>
    %cst_14 = arith.constant dense<0.000000e+00> : vector<112xf32>
    %36 = vector.multi_reduction <add>, %35, %cst_14 [1] : vector<112x112xf32> to vector<112xf32>
    %37 = vector.shape_cast %36 : vector<112xf32> to vector<112x1xf32>
    %cst_15 = arith.constant 9.99999974E-6 : f32
    %38 = vector.broadcast %cst_15 : f32 to vector<112x1xf32>
    %39 = arith.addf %15, %38 : vector<112x1xf32>
    %40 = math.rsqrt %39 : vector<112x1xf32>
    %41 = arith.mulf %40, %27 : vector<112x1xf32>
    %42 = arith.mulf %8, %41 : vector<112x1xf32>
    %43 = arith.subf %37, %42 : vector<112x1xf32>
    %44 = vector.broadcast %41 : vector<112x1xf32> to vector<112x196xf32>
    %45 = arith.mulf %4, %44 : vector<112x196xf32>
    %46 = vector.broadcast %43 : vector<112x1xf32> to vector<112x196xf32>
    %47 = arith.addf %45, %46 : vector<112x196xf32>
    %cst_16 = arith.constant 0.000000e+00 : f32
    %48 = vector.broadcast %cst_16 : f32 to vector<112x196xf32>
    %49 = arith.maximumf %47, %48 : vector<112x196xf32>
    %c0_17 = arith.constant 0 : index
    %c0_18 = arith.constant 0 : index
    %50 = vector.load %arg4[%c0_17, %c0_18] : memref<112x196xf32, #tpu.memory_space<vmem>>, vector<112x196xf32>
    tpu.vector_store %arg4[%c0_17, %c0_18], %49 {strides = array<i32>} : memref<112x196xf32, #tpu.memory_space<vmem>>, vector<112x196xf32>,
    %51 = tpu.iota {dimensions = array<i32: 0>} : vector<112x112xi32>
    %52 = tpu.iota {dimensions = array<i32: 1>} : vector<112x112xi32>
    %53 = arith.cmpi eq, %51, %52 : vector<112x112xi32>
    %54 = vector.shape_cast %8 : vector<112x1xf32> to vector<112x1xf32>
    %55 = vector.broadcast %54 : vector<112x1xf32> to vector<112x112xf32>
    %cst_19 = arith.constant 0.000000e+00 : f32
    %56 = vector.broadcast %cst_19 : f32 to vector<112x112xf32>
    %57 = arith.select %53, %55, %56 : vector<112x112xi1>, vector<112x112xf32>
    %cst_20 = arith.constant dense<0.000000e+00> : vector<112xf32>
    %58 = vector.multi_reduction <add>, %57, %cst_20 [0] : vector<112x112xf32> to vector<112xf32>
    %59 = vector.shape_cast %58 : vector<112xf32> to vector<1x112xf32>
    %60 = tpu.iota {dimensions = array<i32: 0>} : vector<112x112xi32>
    %61 = tpu.iota {dimensions = array<i32: 1>} : vector<112x112xi32>
    %62 = arith.cmpi eq, %60, %61 : vector<112x112xi32>
    %63 = vector.shape_cast %15 : vector<112x1xf32> to vector<112x1xf32>
    %64 = vector.broadcast %63 : vector<112x1xf32> to vector<112x112xf32>
    %cst_21 = arith.constant 0.000000e+00 : f32
    %65 = vector.broadcast %cst_21 : f32 to vector<112x112xf32>
    %66 = arith.select %62, %64, %65 : vector<112x112xi1>, vector<112x112xf32>
    %cst_22 = arith.constant dense<0.000000e+00> : vector<112xf32>
    %67 = vector.multi_reduction <add>, %66, %cst_22 [0] : vector<112x112xf32> to vector<112xf32>
    %68 = vector.shape_cast %67 : vector<112xf32> to vector<1x112xf32>
    %69 = tpu.concatenate %59, %68 in 0 : vector<1x112xf32>, vector<1x112xf32> -> vector<2x112xf32>
    %c0_23 = arith.constant 0 : index
    %c0_24 = arith.constant 0 : index
    %c0_25 = arith.constant 0 : index
    %70 = vector.load %arg5[%c0_23, %c0_24, %c0_25] : memref<1x2x112xf32, #tpu.memory_space<vmem>>, vector<1x2x112xf32>
    %71 = vector.shape_cast %70 : vector<1x2x112xf32> to vector<2x112xf32>
    %72 = vector.shape_cast %69 : vector<2x112xf32> to vector<1x2x112xf32>
    tpu.vector_store %arg5[%c0_23, %c0_24, %c0_25], %72 {strides = array<i32>} : memref<1x2x112xf32, #tpu.memory_space<vmem>>, vector<1x2x112xf32>,
    return
  }
  func.func @transform_0(%arg0: i32) -> (i32, i32) {
    %c0_i32 = arith.constant 0 : i32
    %c0_i32_0 = arith.constant 0 : i32
    %c0_i32_1 = arith.constant 0 : i32
    return %c0_i32, %c0_i32_0 : i32, i32
  }
  func.func @transform_1(%arg0: i32) -> (i32, i32) {
    %c0_i32 = arith.constant 0 : i32
    %c0_i32_0 = arith.constant 0 : i32
    return %arg0, %c0_i32 : i32, i32
  }
  func.func @transform_2(%arg0: i32) -> (i32, i32, i32) {
    %c0_i32 = arith.constant 0 : i32
    %c0_i32_0 = arith.constant 0 : i32
    %c0_i32_1 = arith.constant 0 : i32
    return %arg0, %c0_i32, %c0_i32_0 : i32, i32, i32
  }
  func.func @transform_3(%arg0: i32) -> (i32, i32) {
    %c0_i32 = arith.constant 0 : i32
    %c0_i32_0 = arith.constant 0 : i32
    return %arg0, %c0_i32 : i32, i32
  }
  func.func @transform_4(%arg0: i32) -> (i32, i32, i32) {
    %c0_i32 = arith.constant 0 : i32
    %c0_i32_0 = arith.constant 0 : i32
    %c0_i32_1 = arith.constant 0 : i32
    return %arg0, %c0_i32, %c0_i32_0 : i32, i32, i32
  }
}

</mosaic_0001>

<llo_original>
// kernel: relu_conv_bn_relu.1
$region0: #{relu_conv_bn_relu.1}
  #allocation0 [shape = 'u32[]', space=smem, size = 0x4, offset = 0x4, fixed_abs, tag = 'smem constant byte address 0x4 - core index']
  #allocation1 [shape = 'u32[144,128]{1,0:T(1,128)}', space=vmem, size = 0x12000, scoped, tag = 'internal scratch']
  %s0 = inlined_call_operand.vmem [shape: f32[336,196], index: 0, kind: input, shape index: {}]
  %s1 = inlined_call_operand.vmem [shape: f32[336,336], index: 1, kind: input, shape index: {}]
  %s2 = inlined_call_operand.vmem [shape: f32[3,2,112], index: 2, kind: input, shape index: {}]
  %s3 = inlined_call_operand.vmem [shape: f32[336,196], index: 3, kind: output, shape index: {0}]
  %s4 = inlined_call_operand.hbm [shape: f32[3,2,112], index: 4, kind: output, shape index: {1}]
  %5 = xla_tuple %s3, %s4
  %s6 = sld [smem:[#allocation0]]
  $region53: #{relu_conv_bn_relu.1} parent=0
    _
  %s8 = ssub.s32 1, %s6
  %s9 = scalar_select 0, %s8, %s6
  $region1: #{relu_conv_bn_relu.1} parent=0
    #allocation2 [shape = 'u8[2048]{0}', space=vmem, size = 0x800, scoped, tag = 'output window, operand 1']
    #allocation3 [shape = 's32[2]{0}', space=sflag, size = 0x8, scoped, tag = 'scoped memory for relu_conv_bn_relu.1']
    %10 = vsyncpa [#allocation3], 0
    %s11 = scalar_lea.sflag [#allocation3], 1
    %12 = vsyncpa %s11, 0
    loop: start=0, step=1, limit=5
    $region2: #{relu_conv_bn_relu.1} parent=1 // loop_pre_header
      _
    $region3: #{relu_conv_bn_relu.1} parent=1 // loop_header
      %s14 = sphi 0, %s18
      %p15 = scmp.ge.s32.totalorder %s14, 5
      %s22 = sphi 0, %s22
      %s24 = sphi 0, %s22
      %s25 = sphi 0, %s24
      %s39 = sphi 0, %s25
      %s45 = sphi 0, %s47
      %s48 = sphi 0, %s45
      %s49 = sphi 0, %s48
      %s65 = sphi 0, %s49
      %s71 = sphi 0, %s73
      %s74 = sphi 0, %s71
      %s75 = sphi 0, %s74
      %s91 = sphi 0, %s75
      %s97 = sphi 0, %s99
      %s100 = sphi 0, %s97
      %s101 = sphi 0, %s100
      %s117 = sphi 0, %s101
      %s123 = sphi 0, %s125
      %s126 = sphi 0, %s123
      %s127 = sphi 0, %s126
      %s143 = sphi 0, %s127
    $region4: #{relu_conv_bn_relu.1} parent=1 // loop_header_branch
      %17 = sbr.rel (%p15) target = $region8
    $region5: #{relu_conv_bn_relu.1} parent=1 // loop_body
      %s19 = ssub.s32 %s14, 1
      %s20 = ssub.s32 %s14, 2
      %s21 = sadd.s32 %s14, 1
      %s23 = sadd.s32 %s22, 1
      %p26 = scmp.eq.s32.totalorder %s14, 2
      %p27 = scmp.ne.s32.totalorder %s22, %s24
      %p28 = scmp.eq.s32.totalorder %s14, 0
      %p29 = por %p27, %p28
      %p30 = scmp.ne.s32.totalorder %s22, %s24
      %p31 = scmp.eq.s32.totalorder %s19, 2
      %p32 = por %p30, %p31
      %p33 = scmp.ne.s32.totalorder %s24, %s25
      %p34 = scmp.eq.s32.totalorder %s19, 0
      %p35 = por %p33, %p34
      %p36 = scmp.ne.s32.totalorder %s24, %s25
      %p37 = scmp.eq.s32.totalorder %s20, 2
      %p38 = por %p36, %p37
      %p40 = scmp.ne.s32.totalorder %s25, %s39
      %p41 = scmp.eq.s32.totalorder %s20, 0
      %p42 = por %p40, %p41
      %s43 = ssub.s32 %s14, %s21
      %p44 = scmp.eq.s32.totalorder %s43, 0
      %s46 = sadd.s32 %s45, 1
      %s47 = scalar_select %p44, %s45, %s46
      %p50 = pneg %p44
      %p51 = scmp.eq.s32.totalorder %s14, 2
      %p52 = por %p50, %p51
      %p53 = scmp.ne.s32.totalorder %s45, %s48
      %p54 = scmp.eq.s32.totalorder %s14, 0
      %p55 = por %p53, %p54
      %p56 = scmp.ne.s32.totalorder %s45, %s48
      %p57 = scmp.eq.s32.totalorder %s19, 2
      %p58 = por %p56, %p57
      %p59 = scmp.ne.s32.totalorder %s48, %s49
      %p60 = scmp.eq.s32.totalorder %s19, 0
      %p61 = por %p59, %p60
      %p62 = scmp.ne.s32.totalorder %s48, %s49
      %p63 = scmp.eq.s32.totalorder %s20, 2
      %p64 = por %p62, %p63
      %p66 = scmp.ne.s32.totalorder %s49, %s65
      %p67 = scmp.eq.s32.totalorder %s20, 0
      %p68 = por %p66, %p67
      %s69 = ssub.s32 %s14, %s21
      %p70 = scmp.eq.s32.totalorder %s69, 0
      %s72 = sadd.s32 %s71, 1
      %s73 = scalar_select %p70, %s71, %s72
      %p76 = pneg %p70
      %p77 = scmp.eq.s32.totalorder %s14, 2
      %p78 = por %p76, %p77
      %p79 = scmp.ne.s32.totalorder %s71, %s74
      %p80 = scmp.eq.s32.totalorder %s14, 0
      %p81 = por %p79, %p80
      %p82 = scmp.ne.s32.totalorder %s71, %s74
      %p83 = scmp.eq.s32.totalorder %s19, 2
      %p84 = por %p82, %p83
      %p85 = scmp.ne.s32.totalorder %s74, %s75
      %p86 = scmp.eq.s32.totalorder %s19, 0
      %p87 = por %p85, %p86
      %p88 = scmp.ne.s32.totalorder %s74, %s75
      %p89 = scmp.eq.s32.totalorder %s20, 2
      %p90 = por %p88, %p89
      %p92 = scmp.ne.s32.totalorder %s75, %s91
      %p93 = scmp.eq.s32.totalorder %s20, 0
      %p94 = por %p92, %p93
      %s95 = ssub.s32 %s14, %s21
      %p96 = scmp.eq.s32.totalorder %s95, 0
      %s98 = sadd.s32 %s97, 1
      %s99 = scalar_select %p96, %s97, %s98
      %p102 = pneg %p96
      %p103 = scmp.eq.s32.totalorder %s14, 2
      %p104 = por %p102, %p103
      %p105 = scmp.ne.s32.totalorder %s97, %s100
      %p106 = scmp.eq.s32.totalorder %s14, 0
      %p107 = por %p105, %p106
      %p108 = scmp.ne.s32.totalorder %s97, %s100
      %p109 = scmp.eq.s32.totalorder %s19, 2
      %p110 = por %p108, %p109
      %p111 = scmp.ne.s32.totalorder %s100, %s101
      %p112 = scmp.eq.s32.totalorder %s19, 0
      %p113 = por %p111, %p112
      %p114 = scmp.ne.s32.totalorder %s100, %s101
      %p115 = scmp.eq.s32.totalorder %s20, 2
      %p116 = por %p114, %p115
      %p118 = scmp.ne.s32.totalorder %s101, %s117
      %p119 = scmp.eq.s32.totalorder %s20, 0
      %p120 = por %p118, %p119
      %s121 = ssub.s32 %s14, %s21
      %p122 = scmp.eq.s32.totalorder %s121, 0
      %s124 = sadd.s32 %s123, 1
      %s125 = scalar_select %p122, %s123, %s124
      %p128 = pneg %p122
      %p129 = scmp.eq.s32.totalorder %s14, 2
      %p130 = por %p128, %p129
      %p131 = scmp.ne.s32.totalorder %s123, %s126
      %p132 = scmp.eq.s32.totalorder %s14, 0
      %p133 = por %p131, %p132
      %p134 = scmp.ne.s32.totalorder %s123, %s126
      %p135 = scmp.eq.s32.totalorder %s19, 2
      %p136 = por %p134, %p135
      %p137 = scmp.ne.s32.totalorder %s126, %s127
      %p138 = scmp.eq.s32.totalorder %s19, 0
      %p139 = por %p137, %p138
      %p140 = scmp.ne.s32.totalorder %s126, %s127
      %p141 = scmp.eq.s32.totalorder %s20, 2
      %p142 = por %p140, %p141
      %p144 = scmp.ne.s32.totalorder %s127, %s143
      %p145 = scmp.eq.s32.totalorder %s20, 0
      %p146 = por %p144, %p145
      %p147 = scmp.le.s32.totalorder 1, %s14
      %p148 = scmp.lt.s32.totalorder %s14, 4
      %p149 = pnand %p147, %p148
      %p150 = pneg %p149
      // Predicated region
      $region9: #{relu_conv_bn_relu.1} parent=5 // pred_check
        _
      $region10: #{relu_conv_bn_relu.1} parent=5 // pred_check_branch
        %152 = sbr.rel (%p149) target = $region12
      $region11: #{relu_conv_bn_relu.1} parent=5 // pred_region
        %s153 = ssub.s32 %s14, 1
        // Predicated region
        $region13: #{relu_conv_bn_relu.1} parent=11 // pred_check
          %p154 = pneg %p35
        $region14: #{relu_conv_bn_relu.1} parent=11 // pred_check_branch
          %156 = sbr.rel (%p154) target = $region16
        $region15: #{relu_conv_bn_relu.1} parent=11 // pred_region
          _
        $region16: #{relu_conv_bn_relu.1} parent=11 // pred_fallthru
          _
      $region12: #{relu_conv_bn_relu.1} parent=5 // pred_fallthru
        _
      %p157 = scmp.lt.s32.totalorder %s14, 3
      // Predicated region
      $region17: #{relu_conv_bn_relu.1} parent=5 // pred_check
        %p158 = pneg %p157
      $region18: #{relu_conv_bn_relu.1} parent=5 // pred_check_branch
        %160 = sbr.rel (%p158) target = $region20
      $region19: #{relu_conv_bn_relu.1} parent=5 // pred_region
        // Predicated region
        $region21: #{relu_conv_bn_relu.1} parent=19 // pred_check
          %p161 = pneg %p55
        $region22: #{relu_conv_bn_relu.1} parent=19 // pred_check_branch
          %163 = sbr.rel (%p161) target = $region24
        $region23: #{relu_conv_bn_relu.1} parent=19 // pred_region
          %s164 = smul.u32 14, %s14
          %p165 = scmp.lt.s32.totalorder %s164, 41
          %s166 = scalar_select %p165, %s164, 41
          %s167 = smul.addr %s166, 3
          %s168 = smul.addr %s167, 8
          %s169 = scalar_lea.vmem %s1, %s168
          %s170 = smul.u32 14, %s14
        $region24: #{relu_conv_bn_relu.1} parent=19 // pred_fallthru
          _
        // Predicated region
        $region25: #{relu_conv_bn_relu.1} parent=19 // pred_check
          %p171 = pneg %p81
        $region26: #{relu_conv_bn_relu.1} parent=19 // pred_check_branch
          %173 = sbr.rel (%p171) target = $region28
        $region27: #{relu_conv_bn_relu.1} parent=19 // pred_region
          %p174 = scmp.lt.s32.totalorder %s14, 2
          %s175 = scalar_select %p174, %s14, 2
          %s176 = smul.addr %s175, 2
          %s177 = scalar_lea.vmem %s2, %s176
        $region28: #{relu_conv_bn_relu.1} parent=19 // pred_fallthru
          _
      $region20: #{relu_conv_bn_relu.1} parent=5 // pred_fallthru
        _
      %p178 = scmp.le.s32.totalorder 1, %s14
      %p179 = scmp.lt.s32.totalorder %s14, 4
      %p180 = pnand %p178, %p179
      %p181 = pneg %p180
      // Predicated region
      $region29: #{relu_conv_bn_relu.1} parent=5 // pred_check
        _
      $region30: #{relu_conv_bn_relu.1} parent=5 // pred_check_branch
        %183 = sbr.rel (%p180) target = $region32
      $region31: #{relu_conv_bn_relu.1} parent=5 // pred_region
        %s184 = ssub.s32 %s14, 1
        %p185 = pneg %p35
        %p186 = pneg %p32
        %s187 = smul.u32 14, %s19
        %p188 = scmp.lt.s32.totalorder %s187, 41
        %s189 = scalar_select %p188, %s187, 41
        %s190 = smul.addr %s189, 3
        %s191 = smul.addr %s190, 8
        %s192 = scalar_lea.vmem %s1, %s191
        %p193 = pneg %p61
        %p194 = pneg %p58
        %p195 = scmp.lt.s32.totalorder %s19, 2
        %s196 = scalar_select %p195, %s19, 2
        %s197 = smul.addr %s196, 2
        %s198 = scalar_lea.vmem %s2, %s197
        %p199 = pneg %p87
        %p200 = pneg %p84
        %p201 = pneg %p113
        %p202 = pneg %p110
        %s203 = smul.u32 14, %s19
        %p204 = scmp.lt.s32.totalorder %s203, 41
        %s205 = scalar_select %p204, %s203, 41
        %s206 = smul.addr %s205, 2
        %s207 = smul.addr %s206, 8
        %s208 = scalar_lea.vmem %s3, %s207
        %p209 = pneg %p139
        %p210 = pneg %p136
        %s211 = sand.u32 %s126, 1
        %s212 = scalar_lea.sflag [#allocation3], %s211
        %s213 = sand.u32 %s126, 1
        %s214 = smul.addr %s213, 2
        %s215 = scalar_lea.vmem [#allocation2], %s214
        %s216 = smul.u32 14, %s19
        %p217 = scmp.lt.s32.totalorder %s216, 41
        %s218 = scalar_select %p217, %s216, 41
        %s219 = smul.addr %s218, 3
        %s220 = smul.addr %s219, 8
        %s221 = scalar_lea.vmem %s1, %s220
        %s222 = smul.u32 14, %s19
        %p223 = scmp.lt.s32.totalorder %s19, 2
        %s224 = scalar_select %p223, %s19, 2
        %s225 = smul.addr %s224, 2
        %s226 = scalar_lea.vmem %s2, %s225
        %s227 = smul.u32 14, %s19
        %p228 = scmp.lt.s32.totalorder %s227, 41
        %s229 = scalar_select %p228, %s227, 41
        %s230 = smul.addr %s229, 2
        %s231 = smul.addr %s230, 8
        %s232 = scalar_lea.vmem %s3, %s231
        %s233 = smul.u32 14, %s19
        %v234 = vld [vmem:[%s0] sm:$0xff]
        %v235 = vld [vmem:[%s0 + $0x8] sm:$0xff]
        %v236 = vld [vmem:[%s0 + $0x10] sm:$0xff]
        %v237 = vld [vmem:[%s0 + $0x18] sm:$0xff]
        %v238 = vld [vmem:[%s0 + $0x20] sm:$0xff]
        %v239 = vld [vmem:[%s0 + $0x28] sm:$0xff]
        %v240 = vld [vmem:[%s0 + $0x30] sm:$0xff]
        %v241 = vld [vmem:[%s0 + $0x38] sm:$0xff]
        %v242 = vld [vmem:[%s0 + $0x40] sm:$0xff]
        %v243 = vld [vmem:[%s0 + $0x48] sm:$0xff]
        %v244 = vld [vmem:[%s0 + $0x50] sm:$0xff]
        %v245 = vld [vmem:[%s0 + $0x58] sm:$0xff]
        %v246 = vld [vmem:[%s0 + $0x60] sm:$0xff]
        %v247 = vld [vmem:[%s0 + $0x68] sm:$0xff]
        %v248 = vld [vmem:[%s0 + $0x70] sm:$0xff]
        %v249 = vld [vmem:[%s0 + $0x78] sm:$0xff]
        %v250 = vld [vmem:[%s0 + $0x80] sm:$0xff]
        %v251 = vld [vmem:[%s0 + $0x88] sm:$0xff]
        %v252 = vld [vmem:[%s0 + $0x90] sm:$0xff]
        %v253 = vld [vmem:[%s0 + $0x98] sm:$0xff]
        %v254 = vld [vmem:[%s0 + $0xa0] sm:$0xff]
        %v255 = vld [vmem:[%s0 + $0xa8] sm:$0xff]
        %v256 = vld [vmem:[%s0 + $0xb0] sm:$0xff]
        %v257 = vld [vmem:[%s0 + $0xb8] sm:$0xff]
        %v258 = vld [vmem:[%s0 + $0xc0] sm:$0xff]
        %v259 = vld [vmem:[%s0 + $0xc8] sm:$0xff]
        %v260 = vld [vmem:[%s0 + $0xd0] sm:$0xff]
        %v261 = vld [vmem:[%s0 + $0xd8] sm:$0xff]
        %v262 = vld [vmem:[%s0 + $0xe0] sm:$0xff]
        %v263 = vld [vmem:[%s0 + $0xe8] sm:$0xff]
        %v264 = vld [vmem:[%s0 + $0xf0] sm:$0xff]
        %v265 = vld [vmem:[%s0 + $0xf8] sm:$0xff]
        %v266 = vld [vmem:[%s0 + $0x100] sm:$0xff]
        %v267 = vld [vmem:[%s0 + $0x108] sm:$0xff]
        %v268 = vld [vmem:[%s0 + $0x110] sm:$0xff]
        %v269 = vld [vmem:[%s0 + $0x118] sm:$0xff]
        %v270 = vld [vmem:[%s0 + $0x120] sm:$0xff]
        %v271 = vld [vmem:[%s0 + $0x128] sm:$0xff]
        %v272 = vld [vmem:[%s0 + $0x130] sm:$0xff]
        %v273 = vld [vmem:[%s0 + $0x138] sm:$0xff]
        %v274 = vld [vmem:[%s0 + $0x140] sm:$0xff]
        %v275 = vld [vmem:[%s0 + $0x148] sm:$0xff]
        %v276 = vld [vmem:[%s0 + $0x150] sm:$0xff]
        %v277 = vld [vmem:[%s0 + $0x158] sm:$0xff]
        %v278 = vld [vmem:[%s0 + $0x160] sm:$0xff]
        %v279 = vld [vmem:[%s0 + $0x168] sm:$0xff]
        %v280 = vld [vmem:[%s0 + $0x170] sm:$0xff]
        %v281 = vld [vmem:[%s0 + $0x178] sm:$0xff]
        %v282 = vld [vmem:[%s0 + $0x180] sm:$0xff]
        %v283 = vld [vmem:[%s0 + $0x188] sm:$0xff]
        %v284 = vld [vmem:[%s0 + $0x190] sm:$0xff]
        %v285 = vld [vmem:[%s0 + $0x198] sm:$0xff]
        %v286 = vld [vmem:[%s0 + $0x1a0] sm:$0xff]
        %v287 = vld [vmem:[%s0 + $0x1a8] sm:$0xff]
        %v288 = vld [vmem:[%s0 + $0x1b0] sm:$0xff]
        %v289 = vld [vmem:[%s0 + $0x1b8] sm:$0xff]
        %v290 = vld [vmem:[%s0 + $0x1c0] sm:$0xff]
        %v291 = vld [vmem:[%s0 + $0x1c8] sm:$0xff]
        %v292 = vld [vmem:[%s0 + $0x1d0] sm:$0xff]
        %v293 = vld [vmem:[%s0 + $0x1d8] sm:$0xff]
        %v294 = vld [vmem:[%s0 + $0x1e0] sm:$0xff]
        %v295 = vld [vmem:[%s0 + $0x1e8] sm:$0xff]
        %v296 = vld [vmem:[%s0 + $0x1f0] sm:$0xff]
        %v297 = vld [vmem:[%s0 + $0x1f8] sm:$0xff]
        %v298 = vld [vmem:[%s0 + $0x200] sm:$0xff]
        %v299 = vld [vmem:[%s0 + $0x208] sm:$0xff]
        %v300 = vld [vmem:[%s0 + $0x210] sm:$0xff]
        %v301 = vld [vmem:[%s0 + $0x218] sm:$0xff]
        %v302 = vld [vmem:[%s0 + $0x220] sm:$0xff]
        %v303 = vld [vmem:[%s0 + $0x228] sm:$0xff]
        %v304 = vld [vmem:[%s0 + $0x230] sm:$0xff]
        %v305 = vld [vmem:[%s0 + $0x238] sm:$0xff]
        %v306 = vld [vmem:[%s0 + $0x240] sm:$0xff]
        %v307 = vld [vmem:[%s0 + $0x248] sm:$0xff]
        %v308 = vld [vmem:[%s0 + $0x250] sm:$0xff]
        %v309 = vld [vmem:[%s0 + $0x258] sm:$0xff]
        %v310 = vld [vmem:[%s0 + $0x260] sm:$0xff]
        %v311 = vld [vmem:[%s0 + $0x268] sm:$0xff]
        %v312 = vld [vmem:[%s0 + $0x270] sm:$0xff]
        %v313 = vld [vmem:[%s0 + $0x278] sm:$0xff]
        %v314 = vld [vmem:[%s0 + $0x280] sm:$0xff]
        %v315 = vld [vmem:[%s0 + $0x288] sm:$0xff]
        %v316 = vld [vmem:[%s0 + $0x290] sm:$0xff]
        %v317 = vld [vmem:[%s0 + $0x298] sm:$0xff]
        %v318 = vmax.f32 %v234, 0.0
        %v319 = vmax.f32 %v235, 0.0
        %v320 = vmax.f32 %v236, 0.0
        %v321 = vmax.f32 %v237, 0.0
        %v322 = vmax.f32 %v238, 0.0
        %v323 = vmax.f32 %v239, 0.0
        %v324 = vmax.f32 %v240, 0.0
        %v325 = vmax.f32 %v241, 0.0
        %v326 = vmax.f32 %v242, 0.0
        %v327 = vmax.f32 %v243, 0.0
        %v328 = vmax.f32 %v244, 0.0
        %v329 = vmax.f32 %v245, 0.0
        %v330 = vmax.f32 %v246, 0.0
        %v331 = vmax.f32 %v247, 0.0
        %v332 = vmax.f32 %v248, 0.0
        %v333 = vmax.f32 %v249, 0.0
        %v334 = vmax.f32 %v250, 0.0
        %v335 = vmax.f32 %v251, 0.0
        %v336 = vmax.f32 %v252, 0.0
        %v337 = vmax.f32 %v253, 0.0
        %v338 = vmax.f32 %v254, 0.0
        %v339 = vmax.f32 %v255, 0.0
        %v340 = vmax.f32 %v256, 0.0
        %v341 = vmax.f32 %v257, 0.0
        %v342 = vmax.f32 %v258, 0.0
        %v343 = vmax.f32 %v259, 0.0
        %v344 = vmax.f32 %v260, 0.0
        %v345 = vmax.f32 %v261, 0.0
        %v346 = vmax.f32 %v262, 0.0
        %v347 = vmax.f32 %v263, 0.0
        %v348 = vmax.f32 %v264, 0.0
        %v349 = vmax.f32 %v265, 0.0
        %v350 = vmax.f32 %v266, 0.0
        %v351 = vmax.f32 %v267, 0.0
        %v352 = vmax.f32 %v268, 0.0
        %v353 = vmax.f32 %v269, 0.0
        %v354 = vmax.f32 %v270, 0.0
        %v355 = vmax.f32 %v271, 0.0
        %v356 = vmax.f32 %v272, 0.0
        %v357 = vmax.f32 %v273, 0.0
        %v358 = vmax.f32 %v274, 0.0
        %v359 = vmax.f32 %v275, 0.0
        %v360 = vmax.f32 %v276, 0.0
        %v361 = vmax.f32 %v277, 0.0
        %v362 = vmax.f32 %v278, 0.0
        %v363 = vmax.f32 %v279, 0.0
        %v364 = vmax.f32 %v280, 0.0
        %v365 = vmax.f32 %v281, 0.0
        %v366 = vmax.f32 %v282, 0.0
        %v367 = vmax.f32 %v283, 0.0
        %v368 = vmax.f32 %v284, 0.0
        %v369 = vmax.f32 %v285, 0.0
        %v370 = vmax.f32 %v286, 0.0
        %v371 = vmax.f32 %v287, 0.0
        %v372 = vmax.f32 %v288, 0.0
        %v373 = vmax.f32 %v289, 0.0
        %v374 = vmax.f32 %v290, 0.0
        %v375 = vmax.f32 %v291, 0.0
        %v376 = vmax.f32 %v292, 0.0
        %v377 = vmax.f32 %v293, 0.0
        %v378 = vmax.f32 %v294, 0.0
        %v379 = vmax.f32 %v295, 0.0
        %v380 = vmax.f32 %v296, 0.0
        %v381 = vmax.f32 %v297, 0.0
        %v382 = vmax.f32 %v298, 0.0
        %v383 = vmax.f32 %v299, 0.0
        %v384 = vmax.f32 %v300, 0.0
        %v385 = vmax.f32 %v301, 0.0
        %v386 = vmax.f32 %v302, 0.0
        %v387 = vmax.f32 %v303, 0.0
        %v388 = vmax.f32 %v304, 0.0
        %v389 = vmax.f32 %v305, 0.0
        %v390 = vmax.f32 %v306, 0.0
        %v391 = vmax.f32 %v307, 0.0
        %v392 = vmax.f32 %v308, 0.0
        %v393 = vmax.f32 %v309, 0.0
        %v394 = vmax.f32 %v310, 0.0
        %v395 = vmax.f32 %v311, 0.0
        %v396 = vmax.f32 %v312, 0.0
        %v397 = vmax.f32 %v313, 0.0
        %v398 = vmax.f32 %v314, 0.0
        %v399 = vmax.f32 %v315, 0.0
        %v400 = vmax.f32 %v316, 0.0
        %v401 = vmax.f32 %v317, 0.0
        %v402 = vld [vmem:[%s221] sm:$0xff]
        %v403 = vld [vmem:[%s221 + $0x8] sm:$0xff]
        %v404 = vld [vmem:[%s221 + $0x10] sm:$0xff]
        %v405 = vld [vmem:[%s221 + $0x18] sm:$0xff]
        %v406 = vld [vmem:[%s221 + $0x20] sm:$0xff]
        %v407 = vld [vmem:[%s221 + $0x28] sm:$0xff]
        %v408 = vld [vmem:[%s221 + $0x30] sm:$0xff]
        %v409 = vld [vmem:[%s221 + $0x38] sm:$0xff]
        %v410 = vld [vmem:[%s221 + $0x40] sm:$0xff]
        %v411 = vld [vmem:[%s221 + $0x48] sm:$0xff]
        %v412 = vld [vmem:[%s221 + $0x50] sm:$0xff]
        %v413 = vld [vmem:[%s221 + $0x58] sm:$0xff]
        %v414 = vld [vmem:[%s221 + $0x60] sm:$0xff]
        %v415 = vld [vmem:[%s221 + $0x68] sm:$0xff]
        %v416 = vld [vmem:[%s221 + $0x70] sm:$0xff]
        %v417 = vld [vmem:[%s221 + $0x78] sm:$0xff]
        %v418 = vld [vmem:[%s221 + $0x80] sm:$0xff]
        %v419 = vld [vmem:[%s221 + $0x88] sm:$0xff]
        %v420 = vld [vmem:[%s221 + $0x90] sm:$0xff]
        %v421 = vld [vmem:[%s221 + $0x98] sm:$0xff]
        %v422 = vld [vmem:[%s221 + $0xa0] sm:$0xff]
        %v423 = vld [vmem:[%s221 + $0xa8] sm:$0xff]
        %v424 = vld [vmem:[%s221 + $0xb0] sm:$0xff]
        %v425 = vld [vmem:[%s221 + $0xb8] sm:$0xff]
        %v426 = vld [vmem:[%s221 + $0xc0] sm:$0xff]
        %v427 = vld [vmem:[%s221 + $0xc8] sm:$0xff]
        %v428 = vld [vmem:[%s221 + $0xd0] sm:$0xff]
        %v429 = vld [vmem:[%s221 + $0xd8] sm:$0xff]
        %v430 = vld [vmem:[%s221 + $0xe0] sm:$0xff]
        %v431 = vld [vmem:[%s221 + $0xe8] sm:$0xff]
        %v432 = vld [vmem:[%s221 + $0xf0] sm:$0xff]
        %v433 = vld [vmem:[%s221 + $0xf8] sm:$0xff]
        %v434 = vld [vmem:[%s221 + $0x100] sm:$0xff]
        %v435 = vld [vmem:[%s221 + $0x108] sm:$0xff]
        %v436 = vld [vmem:[%s221 + $0x110] sm:$0xff]
        %v437 = vld [vmem:[%s221 + $0x118] sm:$0xff]
        %v438 = vld [vmem:[%s221 + $0x120] sm:$0xff]
        %v439 = vld [vmem:[%s221 + $0x128] sm:$0xff]
        %v440 = vld [vmem:[%s221 + $0x130] sm:$0xff]
        %v441 = vld [vmem:[%s221 + $0x138] sm:$0xff]
        %v442 = vld [vmem:[%s221 + $0x140] sm:$0xff]
        %v443 = vld [vmem:[%s221 + $0x148] sm:$0xff]
        %vm444 = vcmask 654336
        %v446 = vsel %vm444, %v404, 0
        %v449 = vsel %vm444, %v407, 0
        %v452 = vsel %vm444, %v410, 0
        %v455 = vsel %vm444, %v413, 0
        %v458 = vsel %vm444, %v416, 0
        %v461 = vsel %vm444, %v419, 0
        %v464 = vsel %vm444, %v422, 0
        %v467 = vsel %vm444, %v425, 0
        %v470 = vsel %vm444, %v428, 0
        %v473 = vsel %vm444, %v431, 0
        %v476 = vsel %vm444, %v434, 0
        %v479 = vsel %vm444, %v437, 0
        %v482 = vsel %vm444, %v440, 0
        %v485 = vsel %vm444, %v443, 0
        %487 = vmatprep.subr.mxu0 %v319
        %488 = vmatpush1.msra.mxu0 %v318
        %489 = vmatprep.subr.mxu0 %v321
        %490 = vmatpush1.msra.mxu0 %v320
        %491 = vmatprep.subr.mxu0 %v323
        %492 = vmatpush1.msra.mxu0 %v322
        %493 = vmatprep.subr.mxu0 %v325
        %494 = vmatpush1.msra.mxu0 %v324
        %495 = vmatprep.subr.mxu0 %v327
        %496 = vmatpush1.msra.mxu0 %v326
        %497 = vmatprep.subr.mxu0 %v329
        %498 = vmatpush1.msra.mxu0 %v328
        %499 = vmatprep.subr.mxu0 %v331
        %500 = vmatpush1.msra.mxu0 %v330
        %501 = vmatprep.subr.mxu0 %v333
        %502 = vmatpush1.msra.mxu0 %v332
        %503 = vmatprep.subr.mxu0 %v335
        %504 = vmatpush1.msra.mxu0 %v334
        %505 = vmatprep.subr.mxu0 %v337
        %506 = vmatpush1.msra.mxu0 %v336
        %507 = vmatprep.subr.mxu0 %v339
        %508 = vmatpush1.msra.mxu0 %v338
        %509 = vmatprep.subr.mxu0 %v341
        %510 = vmatpush1.msra.mxu0 %v340
        %511 = vmatprep.subr.mxu0 %v343
        %512 = vmatpush1.msra.mxu0 %v342
        %513 = vmatprep.subr.mxu0 %v345
        %514 = vmatpush1.msra.mxu0 %v344
        %515 = vmatprep.subr.mxu0 %v347
        %516 = vmatpush1.msra.mxu0 %v346
        %517 = vmatprep.subr.mxu0 %v349
        %518 = vmatpush1.msra.mxu0 %v348
        %519 = vmatprep.subr.mxu0 %v351
        %520 = vmatpush1.msra.mxu0 %v350
        %521 = vmatprep.subr.mxu0 %v353
        %522 = vmatpush1.msra.mxu0 %v352
        %523 = vmatprep.subr.mxu0 %v355
        %524 = vmatpush1.msra.mxu0 %v354
        %525 = vmatprep.subr.mxu0 %v357
        %526 = vmatpush1.msra.mxu0 %v356
        %527 = vmatprep.subr.mxu0 %v359
        %528 = vmatpush1.msra.mxu0 %v358
        %529 = vmatprep.subr.mxu0 %v361
        %530 = vmatpush1.msra.mxu0 %v360
        %531 = vmatprep.subr.mxu0 %v363
        %532 = vmatpush1.msra.mxu0 %v362
        %533 = vmatprep.subr.mxu0 %v365
        %534 = vmatpush1.msra.mxu0 %v364
        %535 = vmatprep.subr.mxu0 %v367
        %536 = vmatpush1.msra.mxu0 %v366
        %537 = vmatprep.subr.mxu0 %v369
        %538 = vmatpush1.msra.mxu0 %v368
        %539 = vmatprep.subr.mxu0 %v371
        %540 = vmatpush1.msra.mxu0 %v370
        %541 = vmatprep.subr.mxu0 %v373
        %542 = vmatpush1.msra.mxu0 %v372
        %543 = vmatprep.subr.mxu0 %v375
        %544 = vmatpush1.msra.mxu0 %v374
        %545 = vmatprep.subr.mxu0 %v377
        %546 = vmatpush1.msra.mxu0 %v376
        %547 = vmatprep.subr.mxu0 %v379
        %548 = vmatpush1.msra.mxu0 %v378
        %549 = vmatprep.subr.mxu0 %v381
        %550 = vmatpush1.msra.mxu0 %v380
        %551 = vmatprep.mubr.f32.mxu0 %v403
        %552 = vmatmul.mubr.f32.gmra.mrb[0].mxu0 %v402
        %v553 = vpop.f32.mrb[0].mxu0
        %v554 = vadd.f32 0.0, %v553
        %v555 = vpop.f32.mrb[0].mxu0
        %v556 = vadd.f32 0.0, %v555
        %557 = vmatprep.mubr.f32.mxu0 %v406
        %558 = vmatmul.mubr.f32.gmra.mrb[0].mxu0 %v405
        %v559 = vpop.f32.mrb[0].mxu0
        %v560 = vadd.f32 0.0, %v559
        %v561 = vpop.f32.mrb[0].mxu0
        %v562 = vadd.f32 0.0, %v561
        %563 = vmatprep.mubr.f32.mxu0 %v409
        %564 = vmatmul.mubr.f32.gmra.mrb[0].mxu0 %v408
        %v565 = vpop.f32.mrb[0].mxu0
        %v566 = vadd.f32 0.0, %v565
        %v567 = vpop.f32.mrb[0].mxu0
        %v568 = vadd.f32 0.0, %v567
        %569 = vmatprep.mubr.f32.mxu0 %v412
        %570 = vmatmul.mubr.f32.gmra.mrb[0].mxu0 %v411
        %v571 = vpop.f32.mrb[0].mxu0
        %v572 = vadd.f32 0.0, %v571
        %v573 = vpop.f32.mrb[0].mxu0
        %v574 = vadd.f32 0.0, %v573
        %575 = vmatprep.mubr.f32.mxu0 %v415
        %576 = vmatmul.mubr.f32.gmra.mrb[0].mxu0 %v414
        %v577 = vpop.f32.mrb[0].mxu0
        %v578 = vadd.f32 0.0, %v577
        %v579 = vpop.f32.mrb[0].mxu0
        %v580 = vadd.f32 0.0, %v579
        %581 = vmatprep.mubr.f32.mxu0 %v418
        %582 = vmatmul.mubr.f32.gmra.mrb[0].mxu0 %v417
        %v583 = vpop.f32.mrb[0].mxu0
        %v584 = vadd.f32 0.0, %v583
        %v585 = vpop.f32.mrb[0].mxu0
        %v586 = vadd.f32 0.0, %v585
        %587 = vmatprep.mubr.f32.mxu0 %v421
        %588 = vmatmul.mubr.f32.gmra.mrb[0].mxu0 %v420
        %v589 = vpop.f32.mrb[0].mxu0
        %v590 = vadd.f32 0.0, %v589
        %v591 = vpop.f32.mrb[0].mxu0
        %v592 = vadd.f32 0.0, %v591
        %593 = vmatprep.mubr.f32.mxu0 %v424
        %594 = vmatmul.mubr.f32.gmra.mrb[0].mxu0 %v423
        %v595 = vpop.f32.mrb[0].mxu0
        %v596 = vadd.f32 0.0, %v595
        %v597 = vpop.f32.mrb[0].mxu0
        %v598 = vadd.f32 0.0, %v597
        %599 = vmatprep.mubr.f32.mxu0 %v427
        %600 = vmatmul.mubr.f32.gmra.mrb[0].mxu0 %v426
        %v601 = vpop.f32.mrb[0].mxu0
        %v602 = vadd.f32 0.0, %v601
        %v603 = vpop.f32.mrb[0].mxu0
        %v604 = vadd.f32 0.0, %v603
        %605 = vmatprep.mubr.f32.mxu0 %v430
        %606 = vmatmul.mubr.f32.gmra.mrb[0].mxu0 %v429
        %v607 = vpop.f32.mrb[0].mxu0
        %v608 = vadd.f32 0.0, %v607
        %v609 = vpop.f32.mrb[0].mxu0
        %v610 = vadd.f32 0.0, %v609
        %611 = vmatprep.mubr.f32.mxu0 %v433
        %612 = vmatmul.mubr.f32.gmra.mrb[0].mxu0 %v432
        %v613 = vpop.f32.mrb[0].mxu0
        %v614 = vadd.f32 0.0, %v613
        %v615 = vpop.f32.mrb[0].mxu0
        %v616 = vadd.f32 0.0, %v615
        %617 = vmatprep.mubr.f32.mxu0 %v436
        %618 = vmatmul.mubr.f32.gmra.mrb[0].mxu0 %v435
        %v619 = vpop.f32.mrb[0].mxu0
        %v620 = vadd.f32 0.0, %v619
        %v621 = vpop.f32.mrb[0].mxu0
        %v622 = vadd.f32 0.0, %v621
        %623 = vmatprep.mubr.f32.mxu0 %v439
        %624 = vmatmul.mubr.f32.gmra.mrb[0].mxu0 %v438
        %v625 = vpop.f32.mrb[0].mxu0
        %v626 = vadd.f32 0.0, %v625
        %v627 = vpop.f32.mrb[0].mxu0
        %v628 = vadd.f32 0.0, %v627
        %629 = vmatprep.mubr.f32.mxu0 %v442
        %630 = vmatmul.mubr.f32.gmra.mrb[0].mxu0 %v441
        %v631 = vpop.f32.mrb[0].mxu0
        %v632 = vadd.f32 0.0, %v631
        %v633 = vpop.f32.mrb[0].mxu0
        %v634 = vadd.f32 0.0, %v633
        %635 = vdwg.mxu0
        %636 = vmatprep.subr.mxu0 %v383
        %637 = vmatpush1.msra.mxu0 %v382
        %638 = vmatprep.subr.mxu0 %v385
        %639 = vmatpush1.msra.mxu0 %v384
        %640 = vmatprep.subr.mxu0 %v387
        %641 = vmatpush1.msra.mxu0 %v386
        %642 = vmatprep.subr.mxu0 %v389
        %643 = vmatpush1.msra.mxu0 %v388
        %644 = vmatprep.subr.mxu0 %v391
        %645 = vmatpush1.msra.mxu0 %v390
        %646 = vmatprep.subr.mxu0 %v393
        %647 = vmatpush1.msra.mxu0 %v392
        %648 = vmatprep.subr.mxu0 %v395
        %649 = vmatpush1.msra.mxu0 %v394
        %650 = vmatprep.subr.mxu0 %v397
        %651 = vmatpush1.msra.mxu0 %v396
        %652 = vmatprep.subr.mxu0 %v399
        %653 = vmatpush1.msra.mxu0 %v398
        %654 = vmatprep.subr.mxu0 %v401
        %655 = vmatpush1.msra.mxu0 %v400
        %656 = vmatprep.subr.mxu0 0.0
        %657 = vmatpush1.msra.mxu0 0.0
        %658 = vmatprep.subr.mxu0 0.0
        %659 = vmatpush1.msra.mxu0 0.0
        %660 = vmatprep.subr.mxu0 0.0
        %661 = vmatpush1.msra.mxu0 0.0
        %662 = vmatprep.subr.mxu0 0.0
        %663 = vmatpush1.msra.mxu0 0.0
        %664 = vmatprep.subr.mxu0 0.0
        %665 = vmatpush1.msra.mxu0 0.0
        %666 = vmatprep.subr.mxu0 0.0
        %667 = vmatpush1.msra.mxu0 0.0
        %668 = vmatprep.subr.mxu0 0.0
        %669 = vmatpush1.msra.mxu0 0.0
        %670 = vmatprep.subr.mxu0 0.0
        %671 = vmatpush1.msra.mxu0 0.0
        %672 = vmatprep.subr.mxu0 0.0
        %673 = vmatpush1.msra.mxu0 0.0
        %674 = vmatprep.subr.mxu0 0.0
        %675 = vmatpush1.msra.mxu0 0.0
        %676 = vmatprep.subr.mxu0 0.0
        %677 = vmatpush1.msra.mxu0 0.0
        %678 = vmatprep.subr.mxu0 0.0
        %679 = vmatpush1.msra.mxu0 0.0
        %680 = vmatprep.subr.mxu0 0.0
        %681 = vmatpush1.msra.mxu0 0.0
        %682 = vmatprep.subr.mxu0 0.0
        %683 = vmatpush1.msra.mxu0 0.0
        %684 = vmatprep.subr.mxu0 0.0
        %685 = vmatpush1.msra.mxu0 0.0
        %686 = vmatprep.subr.mxu0 0.0
        %687 = vmatpush1.msra.mxu0 0.0
        %688 = vmatprep.subr.mxu0 0.0
        %689 = vmatpush1.msra.mxu0 0.0
        %690 = vmatprep.subr.mxu0 0.0
        %691 = vmatpush1.msra.mxu0 0.0
        %692 = vmatprep.subr.mxu0 0.0
        %693 = vmatpush1.msra.mxu0 0.0
        %694 = vmatprep.subr.mxu0 0.0
        %695 = vmatpush1.msra.mxu0 0.0
        %696 = vmatprep.subr.mxu0 0.0
        %697 = vmatpush1.msra.mxu0 0.0
        %698 = vmatprep.subr.mxu0 0.0
        %699 = vmatpush1.msra.mxu0 0.0
        %700 = vmatprep.mubr.f32.mxu0 0.0
        %701 = vmatmul.mubr.f32.gmra.mrb[0].mxu0 %v446
        %v702 = vpop.f32.mrb[0].mxu0
        %v703 = vadd.f32 %v554, %v702
        %v704 = vpop.f32.mrb[0].mxu0
        %v705 = vadd.f32 %v556, %v704
        %706 = vmatprep.mubr.f32.mxu0 0.0
        %707 = vmatmul.mubr.f32.gmra.mrb[0].mxu0 %v449
        %v708 = vpop.f32.mrb[0].mxu0
        %v709 = vadd.f32 %v560, %v708
        %v710 = vpop.f32.mrb[0].mxu0
        %v711 = vadd.f32 %v562, %v710
        %712 = vmatprep.mubr.f32.mxu0 0.0
        %713 = vmatmul.mubr.f32.gmra.mrb[0].mxu0 %v452
        %v714 = vpop.f32.mrb[0].mxu0
        %v715 = vadd.f32 %v566, %v714
        %v716 = vpop.f32.mrb[0].mxu0
        %v717 = vadd.f32 %v568, %v716
        %718 = vmatprep.mubr.f32.mxu0 0.0
        %719 = vmatmul.mubr.f32.gmra.mrb[0].mxu0 %v455
        %v720 = vpop.f32.mrb[0].mxu0
        %v721 = vadd.f32 %v572, %v720
        %v722 = vpop.f32.mrb[0].mxu0
        %v723 = vadd.f32 %v574, %v722
        %724 = vmatprep.mubr.f32.mxu0 0.0
        %725 = vmatmul.mubr.f32.gmra.mrb[0].mxu0 %v458
        %v726 = vpop.f32.mrb[0].mxu0
        %v727 = vadd.f32 %v578, %v726
        %v728 = vpop.f32.mrb[0].mxu0
        %v729 = vadd.f32 %v580, %v728
        %730 = vmatprep.mubr.f32.mxu0 0.0
        %731 = vmatmul.mubr.f32.gmra.mrb[0].mxu0 %v461
        %v732 = vpop.f32.mrb[0].mxu0
        %v733 = vadd.f32 %v584, %v732
        %v734 = vpop.f32.mrb[0].mxu0
        %v735 = vadd.f32 %v586, %v734
        %736 = vmatprep.mubr.f32.mxu0 0.0
        %737 = vmatmul.mubr.f32.gmra.mrb[0].mxu0 %v464
        %v738 = vpop.f32.mrb[0].mxu0
        %v739 = vadd.f32 %v590, %v738
        %v740 = vpop.f32.mrb[0].mxu0
        %v741 = vadd.f32 %v592, %v740
        %742 = vmatprep.mubr.f32.mxu0 0.0
        %743 = vmatmul.mubr.f32.gmra.mrb[0].mxu0 %v467
        %v744 = vpop.f32.mrb[0].mxu0
        %v745 = vadd.f32 %v596, %v744
        %v746 = vpop.f32.mrb[0].mxu0
        %v747 = vadd.f32 %v598, %v746
        %748 = vmatprep.mubr.f32.mxu0 0.0
        %749 = vmatmul.mubr.f32.gmra.mrb[0].mxu0 %v470
        %v750 = vpop.f32.mrb[0].mxu0
        %v751 = vadd.f32 %v602, %v750
        %v752 = vpop.f32.mrb[0].mxu0
        %v753 = vadd.f32 %v604, %v752
        %754 = vmatprep.mubr.f32.mxu0 0.0
        %755 = vmatmul.mubr.f32.gmra.mrb[0].mxu0 %v473
        %v756 = vpop.f32.mrb[0].mxu0
        %v757 = vadd.f32 %v608, %v756
        %v758 = vpop.f32.mrb[0].mxu0
        %v759 = vadd.f32 %v610, %v758
        %760 = vmatprep.mubr.f32.mxu0 0.0
        %761 = vmatmul.mubr.f32.gmra.mrb[0].mxu0 %v476
        %v762 = vpop.f32.mrb[0].mxu0
        %v763 = vadd.f32 %v614, %v762
        %v764 = vpop.f32.mrb[0].mxu0
        %v765 = vadd.f32 %v616, %v764
        %766 = vmatprep.mubr.f32.mxu0 0.0
        %767 = vmatmul.mubr.f32.gmra.mrb[0].mxu0 %v479
        %v768 = vpop.f32.mrb[0].mxu0
        %v769 = vadd.f32 %v620, %v768
        %v770 = vpop.f32.mrb[0].mxu0
        %v771 = vadd.f32 %v622, %v770
        %772 = vmatprep.mubr.f32.mxu0 0.0
        %773 = vmatmul.mubr.f32.gmra.mrb[0].mxu0 %v482
        %v774 = vpop.f32.mrb[0].mxu0
        %v775 = vadd.f32 %v626, %v774
        %v776 = vpop.f32.mrb[0].mxu0
        %v777 = vadd.f32 %v628, %v776
        %778 = vmatprep.mubr.f32.mxu0 0.0
        %779 = vmatmul.mubr.f32.gmra.mrb[0].mxu0 %v485
        %v780 = vpop.f32.mrb[0].mxu0
        %v781 = vadd.f32 %v632, %v780
        %v782 = vpop.f32.mrb[0].mxu0
        %v783 = vadd.f32 %v634, %v782
        %784 = vdwg.mxu0
        %vm785 = vcmask 556032
        %v786 = vsel %vm785, %v705, 0.0
        %v787 = vadd.f32 %v703, %v786
        %788 = vadd.xlane.f32.xlu0 %v787
        %v789 = vpop.xlane.xlu0 %788
        %v790 = vsel %vm785, %v711, 0.0
        %v791 = vadd.f32 %v709, %v790
        %792 = vadd.xlane.f32.xlu0 %v791
        %v793 = vpop.xlane.xlu0 %792
        %v794 = vsel %vm785, %v717, 0.0
        %v795 = vadd.f32 %v715, %v794
        %796 = vadd.xlane.f32.xlu0 %v795
        %v797 = vpop.xlane.xlu0 %796
        %v798 = vsel %vm785, %v723, 0.0
        %v799 = vadd.f32 %v721, %v798
        %800 = vadd.xlane.f32.xlu0 %v799
        %v801 = vpop.xlane.xlu0 %800
        %v802 = vsel %vm785, %v729, 0.0
        %v803 = vadd.f32 %v727, %v802
        %804 = vadd.xlane.f32.xlu0 %v803
        %v805 = vpop.xlane.xlu0 %804
        %v806 = vsel %vm785, %v735, 0.0
        %v807 = vadd.f32 %v733, %v806
        %808 = vadd.xlane.f32.xlu0 %v807
        %v809 = vpop.xlane.xlu0 %808
        %v810 = vsel %vm785, %v741, 0.0
        %v811 = vadd.f32 %v739, %v810
        %812 = vadd.xlane.f32.xlu0 %v811
        %v813 = vpop.xlane.xlu0 %812
        %v814 = vsel %vm785, %v747, 0.0
        %v815 = vadd.f32 %v745, %v814
        %816 = vadd.xlane.f32.xlu0 %v815
        %v817 = vpop.xlane.xlu0 %816
        %v818 = vsel %vm785, %v753, 0.0
        %v819 = vadd.f32 %v751, %v818
        %820 = vadd.xlane.f32.xlu0 %v819
        %v821 = vpop.xlane.xlu0 %820
        %v822 = vsel %vm785, %v759, 0.0
        %v823 = vadd.f32 %v757, %v822
        %824 = vadd.xlane.f32.xlu0 %v823
        %v825 = vpop.xlane.xlu0 %824
        %v826 = vsel %vm785, %v765, 0.0
        %v827 = vadd.f32 %v763, %v826
        %828 = vadd.xlane.f32.xlu0 %v827
        %v829 = vpop.xlane.xlu0 %828
        %v830 = vsel %vm785, %v771, 0.0
        %v831 = vadd.f32 %v769, %v830
        %832 = vadd.xlane.f32.xlu0 %v831
        %v833 = vpop.xlane.xlu0 %832
        %v834 = vsel %vm785, %v777, 0.0
        %v835 = vadd.f32 %v775, %v834
        %836 = vadd.xlane.f32.xlu0 %v835
        %v837 = vpop.xlane.xlu0 %836
        %v838 = vsel %vm785, %v783, 0.0
        %v839 = vadd.f32 %v781, %v838
        %840 = vadd.xlane.f32.xlu0 %v839
        %v841 = vpop.xlane.xlu0 %840
        %v842 = vmul.f32 %v789, 0.0051020407
        %v843 = vmul.f32 %v793, 0.0051020407
        %v844 = vmul.f32 %v797, 0.0051020407
        %v845 = vmul.f32 %v801, 0.0051020407
        %v846 = vmul.f32 %v805, 0.0051020407
        %v847 = vmul.f32 %v809, 0.0051020407
        %v848 = vmul.f32 %v813, 0.0051020407
        %v849 = vmul.f32 %v817, 0.0051020407
        %v850 = vmul.f32 %v821, 0.0051020407
        %v851 = vmul.f32 %v825, 0.0051020407
        %v852 = vmul.f32 %v829, 0.0051020407
        %v853 = vmul.f32 %v833, 0.0051020407
        %v854 = vmul.f32 %v837, 0.0051020407
        %v855 = vmul.f32 %v841, 0.0051020407
        %v856 = vsub.f32 %v703, %v842
        %v857 = vsub.f32 %v705, %v842
        %v858 = vsub.f32 %v709, %v843
        %v859 = vsub.f32 %v711, %v843
        %v860 = vsub.f32 %v715, %v844
        %v861 = vsub.f32 %v717, %v844
        %v862 = vsub.f32 %v721, %v845
        %v863 = vsub.f32 %v723, %v845
        %v864 = vsub.f32 %v727, %v846
        %v865 = vsub.f32 %v729, %v846
        %v866 = vsub.f32 %v733, %v847
        %v867 = vsub.f32 %v735, %v847
        %v868 = vsub.f32 %v739, %v848
        %v869 = vsub.f32 %v741, %v848
        %v870 = vsub.f32 %v745, %v849
        %v871 = vsub.f32 %v747, %v849
        %v872 = vsub.f32 %v751, %v850
        %v873 = vsub.f32 %v753, %v850
        %v874 = vsub.f32 %v757, %v851
        %v875 = vsub.f32 %v759, %v851
        %v876 = vsub.f32 %v763, %v852
        %v877 = vsub.f32 %v765, %v852
        %v878 = vsub.f32 %v769, %v853
        %v879 = vsub.f32 %v771, %v853
        %v880 = vsub.f32 %v775, %v854
        %v881 = vsub.f32 %v777, %v854
        %v882 = vsub.f32 %v781, %v855
        %v883 = vsub.f32 %v783, %v855
        %v884 = vmul.f32 %v856, %v856
        %v885 = vmul.f32 %v857, %v857
        %v886 = vmul.f32 %v858, %v858
        %v887 = vmul.f32 %v859, %v859
        %v888 = vmul.f32 %v860, %v860
        %v889 = vmul.f32 %v861, %v861
        %v890 = vmul.f32 %v862, %v862
        %v891 = vmul.f32 %v863, %v863
        %v892 = vmul.f32 %v864, %v864
        %v893 = vmul.f32 %v865, %v865
        %v894 = vmul.f32 %v866, %v866
        %v895 = vmul.f32 %v867, %v867
        %v896 = vmul.f32 %v868, %v868
        %v897 = vmul.f32 %v869, %v869
        %v898 = vmul.f32 %v870, %v870
        %v899 = vmul.f32 %v871, %v871
        %v900 = vmul.f32 %v872, %v872
        %v901 = vmul.f32 %v873, %v873
        %v902 = vmul.f32 %v874, %v874
        %v903 = vmul.f32 %v875, %v875
        %v904 = vmul.f32 %v876, %v876
        %v905 = vmul.f32 %v877, %v877
        %v906 = vmul.f32 %v878, %v878
        %v907 = vmul.f32 %v879, %v879
        %v908 = vmul.f32 %v880, %v880
        %v909 = vmul.f32 %v881, %v881
        %v910 = vmul.f32 %v882, %v882
        %v911 = vmul.f32 %v883, %v883
        %v912 = vsel %vm785, %v885, 0.0
        %v913 = vadd.f32 %v884, %v912
        %914 = vadd.xlane.f32.xlu0 %v913
        %v915 = vpop.xlane.xlu0 %914
        %v916 = vsel %vm785, %v887, 0.0
        %v917 = vadd.f32 %v886, %v916
        %918 = vadd.xlane.f32.xlu0 %v917
        %v919 = vpop.xlane.xlu0 %918
        %v920 = vsel %vm785, %v889, 0.0
        %v921 = vadd.f32 %v888, %v920
        %922 = vadd.xlane.f32.xlu0 %v921
        %v923 = vpop.xlane.xlu0 %922
        %v924 = vsel %vm785, %v891, 0.0
        %v925 = vadd.f32 %v890, %v924
        %926 = vadd.xlane.f32.xlu0 %v925
        %v927 = vpop.xlane.xlu0 %926
        %v928 = vsel %vm785, %v893, 0.0
        %v929 = vadd.f32 %v892, %v928
        %930 = vadd.xlane.f32.xlu0 %v929
        %v931 = vpop.xlane.xlu0 %930
        %v932 = vsel %vm785, %v895, 0.0
        %v933 = vadd.f32 %v894, %v932
        %934 = vadd.xlane.f32.xlu0 %v933
        %v935 = vpop.xlane.xlu0 %934
        %v936 = vsel %vm785, %v897, 0.0
        %v937 = vadd.f32 %v896, %v936
        %938 = vadd.xlane.f32.xlu0 %v937
        %v939 = vpop.xlane.xlu0 %938
        %v940 = vsel %vm785, %v899, 0.0
        %v941 = vadd.f32 %v898, %v940
        %942 = vadd.xlane.f32.xlu0 %v941
        %v943 = vpop.xlane.xlu0 %942
        %v944 = vsel %vm785, %v901, 0.0
        %v945 = vadd.f32 %v900, %v944
        %946 = vadd.xlane.f32.xlu0 %v945
        %v947 = vpop.xlane.xlu0 %946
        %v948 = vsel %vm785, %v903, 0.0
        %v949 = vadd.f32 %v902, %v948
        %950 = vadd.xlane.f32.xlu0 %v949
        %v951 = vpop.xlane.xlu0 %950
        %v952 = vsel %vm785, %v905, 0.0
        %v953 = vadd.f32 %v904, %v952
        %954 = vadd.xlane.f32.xlu0 %v953
        %v955 = vpop.xlane.xlu0 %954
        %v956 = vsel %vm785, %v907, 0.0
        %v957 = vadd.f32 %v906, %v956
        %958 = vadd.xlane.f32.xlu0 %v957
        %v959 = vpop.xlane.xlu0 %958
        %v960 = vsel %vm785, %v909, 0.0
        %v961 = vadd.f32 %v908, %v960
        %962 = vadd.xlane.f32.xlu0 %v961
        %v963 = vpop.xlane.xlu0 %962
        %v964 = vsel %vm785, %v911, 0.0
        %v965 = vadd.f32 %v910, %v964
        %966 = vadd.xlane.f32.xlu0 %v965
        %v967 = vpop.xlane.xlu0 %966
        %v968 = vmul.f32 %v915, 0.0051020407
        %v969 = vmul.f32 %v919, 0.0051020407
        %v970 = vmul.f32 %v923, 0.0051020407
        %v971 = vmul.f32 %v927, 0.0051020407
        %v972 = vmul.f32 %v931, 0.0051020407
        %v973 = vmul.f32 %v935, 0.0051020407
        %v974 = vmul.f32 %v939, 0.0051020407
        %v975 = vmul.f32 %v943, 0.0051020407
        %v976 = vmul.f32 %v947, 0.0051020407
        %v977 = vmul.f32 %v951, 0.0051020407
        %v978 = vmul.f32 %v955, 0.0051020407
        %v979 = vmul.f32 %v959, 0.0051020407
        %v980 = vmul.f32 %v963, 0.0051020407
        %v981 = vmul.f32 %v967, 0.0051020407
        %v982 = vld [vmem:[%s226] sm:$0x3]
        %v983 = vlaneseq
        %v984 = vshrl.u32 %v983, 7
        %v985 = vadd.s32 %v984, 8
        %v986 = vadd.s32 %v984, 16
        %v987 = vadd.s32 %v984, 24
        %v988 = vadd.s32 %v984, 32
        %v989 = vadd.s32 %v984, 40
        %v990 = vadd.s32 %v984, 48
        %v991 = vadd.s32 %v984, 56
        %v992 = vadd.s32 %v984, 64
        %v993 = vadd.s32 %v984, 72
        %v994 = vadd.s32 %v984, 80
        %v995 = vadd.s32 %v984, 88
        %v996 = vadd.s32 %v984, 96
        %v997 = vadd.s32 %v984, 104
        %v998 = vlaneseq
        %v999 = vand.u32 %v998, 127
        %vm1000 = vcmp.eq.s32.totalorder %v984, %v999
        %vm1001 = vcmp.eq.s32.totalorder %v985, %v999
        %vm1002 = vcmp.eq.s32.totalorder %v986, %v999
        %vm1003 = vcmp.eq.s32.totalorder %v987, %v999
        %vm1004 = vcmp.eq.s32.totalorder %v988, %v999
        %vm1005 = vcmp.eq.s32.totalorder %v989, %v999
        %vm1006 = vcmp.eq.s32.totalorder %v990, %v999
        %vm1007 = vcmp.eq.s32.totalorder %v991, %v999
        %vm1008 = vcmp.eq.s32.totalorder %v992, %v999
        %vm1009 = vcmp.eq.s32.totalorder %v993, %v999
        %vm1010 = vcmp.eq.s32.totalorder %v994, %v999
        %vm1011 = vcmp.eq.s32.totalorder %v995, %v999
        %vm1012 = vcmp.eq.s32.totalorder %v996, %v999
        %vm1013 = vcmp.eq.s32.totalorder %v997, %v999
        %v1014 = vlaneseq
        %v1015 = vshrl.u32 %v1014, 7
        %v1016 = vsub.s32 0, %v1015
        %v1017 = vrot.slane %v982, %v1016
        %v1018 = vsel %vm1000, %v1017, 0.0
        %v1019 = vsel %vm1001, %v1017, 0.0
        %v1020 = vsel %vm1002, %v1017, 0.0
        %v1021 = vsel %vm1003, %v1017, 0.0
        %v1022 = vsel %vm1004, %v1017, 0.0
        %v1023 = vsel %vm1005, %v1017, 0.0
        %v1024 = vsel %vm1006, %v1017, 0.0
        %v1025 = vsel %vm1007, %v1017, 0.0
        %v1026 = vsel %vm1008, %v1017, 0.0
        %v1027 = vsel %vm1009, %v1017, 0.0
        %v1028 = vsel %vm1010, %v1017, 0.0
        %v1029 = vsel %vm1011, %v1017, 0.0
        %v1030 = vsel %vm1012, %v1017, 0.0
        %v1031 = vsel %vm1013, %v1017, 0.0
        %vm1032 = vcmask 916480
        %v1033 = vsel %vm1032, %v1018, 0.0
        %1034 = vadd.xlane.f32.xlu0 %v1033
        %v1035 = vpop.xlane.xlu0 %1034
        %v1036 = vsel %vm1032, %v1019, 0.0
        %1037 = vadd.xlane.f32.xlu0 %v1036
        %v1038 = vpop.xlane.xlu0 %1037
        %v1039 = vsel %vm1032, %v1020, 0.0
        %1040 = vadd.xlane.f32.xlu0 %v1039
        %v1041 = vpop.xlane.xlu0 %1040
        %v1042 = vsel %vm1032, %v1021, 0.0
        %1043 = vadd.xlane.f32.xlu0 %v1042
        %v1044 = vpop.xlane.xlu0 %1043
        %v1045 = vsel %vm1032, %v1022, 0.0
        %1046 = vadd.xlane.f32.xlu0 %v1045
        %v1047 = vpop.xlane.xlu0 %1046
        %v1048 = vsel %vm1032, %v1023, 0.0
        %1049 = vadd.xlane.f32.xlu0 %v1048
        %v1050 = vpop.xlane.xlu0 %1049
        %v1051 = vsel %vm1032, %v1024, 0.0
        %1052 = vadd.xlane.f32.xlu0 %v1051
        %v1053 = vpop.xlane.xlu0 %1052
        %v1054 = vsel %vm1032, %v1025, 0.0
        %1055 = vadd.xlane.f32.xlu0 %v1054
        %v1056 = vpop.xlane.xlu0 %1055
        %v1057 = vsel %vm1032, %v1026, 0.0
        %1058 = vadd.xlane.f32.xlu0 %v1057
        %v1059 = vpop.xlane.xlu0 %1058
        %v1060 = vsel %vm1032, %v1027, 0.0
        %1061 = vadd.xlane.f32.xlu0 %v1060
        %v1062 = vpop.xlane.xlu0 %1061
        %v1063 = vsel %vm1032, %v1028, 0.0
        %1064 = vadd.xlane.f32.xlu0 %v1063
        %v1065 = vpop.xlane.xlu0 %1064
        %v1066 = vsel %vm1032, %v1029, 0.0
        %1067 = vadd.xlane.f32.xlu0 %v1066
        %v1068 = vpop.xlane.xlu0 %1067
        %v1069 = vsel %vm1032, %v1030, 0.0
        %1070 = vadd.xlane.f32.xlu0 %v1069
        %v1071 = vpop.xlane.xlu0 %1070
        %v1072 = vsel %vm1032, %v1031, 0.0
        %1073 = vadd.xlane.f32.xlu0 %v1072
        %v1074 = vpop.xlane.xlu0 %1073
        %v1075 = vlaneseq
        %v1076 = vshrl.u32 %v1075, 7
        %v1077 = vsub.s32 1, %v1076
        %v1078 = vrot.slane %v982, %v1077
        %v1079 = vsel %vm1000, %v1078, 0.0
        %v1080 = vsel %vm1001, %v1078, 0.0
        %v1081 = vsel %vm1002, %v1078, 0.0
        %v1082 = vsel %vm1003, %v1078, 0.0
        %v1083 = vsel %vm1004, %v1078, 0.0
        %v1084 = vsel %vm1005, %v1078, 0.0
        %v1085 = vsel %vm1006, %v1078, 0.0
        %v1086 = vsel %vm1007, %v1078, 0.0
        %v1087 = vsel %vm1008, %v1078, 0.0
        %v1088 = vsel %vm1009, %v1078, 0.0
        %v1089 = vsel %vm1010, %v1078, 0.0
        %v1090 = vsel %vm1011, %v1078, 0.0
        %v1091 = vsel %vm1012, %v1078, 0.0
        %v1092 = vsel %vm1013, %v1078, 0.0
        %v1093 = vsel %vm1032, %v1079, 0.0
        %1094 = vadd.xlane.f32.xlu0 %v1093
        %v1095 = vpop.xlane.xlu0 %1094
        %v1096 = vsel %vm1032, %v1080, 0.0
        %1097 = vadd.xlane.f32.xlu0 %v1096
        %v1098 = vpop.xlane.xlu0 %1097
        %v1099 = vsel %vm1032, %v1081, 0.0
        %1100 = vadd.xlane.f32.xlu0 %v1099
        %v1101 = vpop.xlane.xlu0 %1100
        %v1102 = vsel %vm1032, %v1082, 0.0
        %1103 = vadd.xlane.f32.xlu0 %v1102
        %v1104 = vpop.xlane.xlu0 %1103
        %v1105 = vsel %vm1032, %v1083, 0.0
        %1106 = vadd.xlane.f32.xlu0 %v1105
        %v1107 = vpop.xlane.xlu0 %1106
        %v1108 = vsel %vm1032, %v1084, 0.0
        %1109 = vadd.xlane.f32.xlu0 %v1108
        %v1110 = vpop.xlane.xlu0 %1109
        %v1111 = vsel %vm1032, %v1085, 0.0
        %1112 = vadd.xlane.f32.xlu0 %v1111
        %v1113 = vpop.xlane.xlu0 %1112
        %v1114 = vsel %vm1032, %v1086, 0.0
        %1115 = vadd.xlane.f32.xlu0 %v1114
        %v1116 = vpop.xlane.xlu0 %1115
        %v1117 = vsel %vm1032, %v1087, 0.0
        %1118 = vadd.xlane.f32.xlu0 %v1117
        %v1119 = vpop.xlane.xlu0 %1118
        %v1120 = vsel %vm1032, %v1088, 0.0
        %1121 = vadd.xlane.f32.xlu0 %v1120
        %v1122 = vpop.xlane.xlu0 %1121
        %v1123 = vsel %vm1032, %v1089, 0.0
        %1124 = vadd.xlane.f32.xlu0 %v1123
        %v1125 = vpop.xlane.xlu0 %1124
        %v1126 = vsel %vm1032, %v1090, 0.0
        %1127 = vadd.xlane.f32.xlu0 %v1126
        %v1128 = vpop.xlane.xlu0 %1127
        %v1129 = vsel %vm1032, %v1091, 0.0
        %1130 = vadd.xlane.f32.xlu0 %v1129
        %v1131 = vpop.xlane.xlu0 %1130
        %v1132 = vsel %vm1032, %v1092, 0.0
        %1133 = vadd.xlane.f32.xlu0 %v1132
        %v1134 = vpop.xlane.xlu0 %1133
        %v1135 = vadd.f32 %v968, 1e-05
        %v1136 = vadd.f32 %v969, 1e-05
        %v1137 = vadd.f32 %v970, 1e-05
        %v1138 = vadd.f32 %v971, 1e-05
        %v1139 = vadd.f32 %v972, 1e-05
        %v1140 = vadd.f32 %v973, 1e-05
        %v1141 = vadd.f32 %v974, 1e-05
        %v1142 = vadd.f32 %v975, 1e-05
        %v1143 = vadd.f32 %v976, 1e-05
        %v1144 = vadd.f32 %v977, 1e-05
        %v1145 = vadd.f32 %v978, 1e-05
        %v1146 = vadd.f32 %v979, 1e-05
        %v1147 = vadd.f32 %v980, 1e-05
        %v1148 = vadd.f32 %v981, 1e-05
        %v1149 = vrsqrt.pop %v1135
        %v1150 = vrsqrt.pop %v1136
        %v1151 = vrsqrt.pop %v1137
        %v1152 = vrsqrt.pop %v1138
        %v1153 = vrsqrt.pop %v1139
        %v1154 = vrsqrt.pop %v1140
        %v1155 = vrsqrt.pop %v1141
        %v1156 = vrsqrt.pop %v1142
        %v1157 = vrsqrt.pop %v1143
        %v1158 = vrsqrt.pop %v1144
        %v1159 = vrsqrt.pop %v1145
        %v1160 = vrsqrt.pop %v1146
        %v1161 = vrsqrt.pop %v1147
        %v1162 = vrsqrt.pop %v1148
        %v1163 = vmul.f32 %v1149, %v1035
        %v1164 = vmul.f32 %v1150, %v1038
        %v1165 = vmul.f32 %v1151, %v1041
        %v1166 = vmul.f32 %v1152, %v1044
        %v1167 = vmul.f32 %v1153, %v1047
        %v1168 = vmul.f32 %v1154, %v1050
        %v1169 = vmul.f32 %v1155, %v1053
        %v1170 = vmul.f32 %v1156, %v1056
        %v1171 = vmul.f32 %v1157, %v1059
        %v1172 = vmul.f32 %v1158, %v1062
        %v1173 = vmul.f32 %v1159, %v1065
        %v1174 = vmul.f32 %v1160, %v1068
        %v1175 = vmul.f32 %v1161, %v1071
        %v1176 = vmul.f32 %v1162, %v1074
        %v1177 = vmul.f32 %v842, %v1163
        %v1178 = vmul.f32 %v843, %v1164
        %v1179 = vmul.f32 %v844, %v1165
        %v1180 = vmul.f32 %v845, %v1166
        %v1181 = vmul.f32 %v846, %v1167
        %v1182 = vmul.f32 %v847, %v1168
        %v1183 = vmul.f32 %v848, %v1169
        %v1184 = vmul.f32 %v849, %v1170
        %v1185 = vmul.f32 %v850, %v1171
        %v1186 = vmul.f32 %v851, %v1172
        %v1187 = vmul.f32 %v852, %v1173
        %v1188 = vmul.f32 %v853, %v1174
        %v1189 = vmul.f32 %v854, %v1175
        %v1190 = vmul.f32 %v855, %v1176
        %v1191 = vsub.f32 %v1095, %v1177
        %v1192 = vsub.f32 %v1098, %v1178
        %v1193 = vsub.f32 %v1101, %v1179
        %v1194 = vsub.f32 %v1104, %v1180
        %v1195 = vsub.f32 %v1107, %v1181
        %v1196 = vsub.f32 %v1110, %v1182
        %v1197 = vsub.f32 %v1113, %v1183
        %v1198 = vsub.f32 %v1116, %v1184
        %v1199 = vsub.f32 %v1119, %v1185
        %v1200 = vsub.f32 %v1122, %v1186
        %v1201 = vsub.f32 %v1125, %v1187
        %v1202 = vsub.f32 %v1128, %v1188
        %v1203 = vsub.f32 %v1131, %v1189
        %v1204 = vsub.f32 %v1134, %v1190
        %v1205 = vmul.f32 %v703, %v1163
        %v1206 = vmul.f32 %v705, %v1163
        %v1207 = vmul.f32 %v709, %v1164
        %v1208 = vmul.f32 %v711, %v1164
        %v1209 = vmul.f32 %v715, %v1165
        %v1210 = vmul.f32 %v717, %v1165
        %v1211 = vmul.f32 %v721, %v1166
        %v1212 = vmul.f32 %v723, %v1166
        %v1213 = vmul.f32 %v727, %v1167
        %v1214 = vmul.f32 %v729, %v1167
        %v1215 = vmul.f32 %v733, %v1168
        %v1216 = vmul.f32 %v735, %v1168
        %v1217 = vmul.f32 %v739, %v1169
        %v1218 = vmul.f32 %v741, %v1169
        %v1219 = vmul.f32 %v745, %v1170
        %v1220 = vmul.f32 %v747, %v1170
        %v1221 = vmul.f32 %v751, %v1171
        %v1222 = vmul.f32 %v753, %v1171
        %v1223 = vmul.f32 %v757, %v1172
        %v1224 = vmul.f32 %v759, %v1172
        %v1225 = vmul.f32 %v763, %v1173
        %v1226 = vmul.f32 %v765, %v1173
        %v1227 = vmul.f32 %v769, %v1174
        %v1228 = vmul.f32 %v771, %v1174
        %v1229 = vmul.f32 %v775, %v1175
        %v1230 = vmul.f32 %v777, %v1175
        %v1231 = vmul.f32 %v781, %v1176
        %v1232 = vmul.f32 %v783, %v1176
        %v1233 = vadd.f32 %v1205, %v1191
        %v1234 = vadd.f32 %v1206, %v1191
        %v1235 = vadd.f32 %v1207, %v1192
        %v1236 = vadd.f32 %v1208, %v1192
        %v1237 = vadd.f32 %v1209, %v1193
        %v1238 = vadd.f32 %v1210, %v1193
        %v1239 = vadd.f32 %v1211, %v1194
        %v1240 = vadd.f32 %v1212, %v1194
        %v1241 = vadd.f32 %v1213, %v1195
        %v1242 = vadd.f32 %v1214, %v1195
        %v1243 = vadd.f32 %v1215, %v1196
        %v1244 = vadd.f32 %v1216, %v1196
        %v1245 = vadd.f32 %v1217, %v1197
        %v1246 = vadd.f32 %v1218, %v1197
        %v1247 = vadd.f32 %v1219, %v1198
        %v1248 = vadd.f32 %v1220, %v1198
        %v1249 = vadd.f32 %v1221, %v1199
        %v1250 = vadd.f32 %v1222, %v1199
        %v1251 = vadd.f32 %v1223, %v1200
        %v1252 = vadd.f32 %v1224, %v1200
        %v1253 = vadd.f32 %v1225, %v1201
        %v1254 = vadd.f32 %v1226, %v1201
        %v1255 = vadd.f32 %v1227, %v1202
        %v1256 = vadd.f32 %v1228, %v1202
        %v1257 = vadd.f32 %v1229, %v1203
        %v1258 = vadd.f32 %v1230, %v1203
        %v1259 = vadd.f32 %v1231, %v1204
        %v1260 = vadd.f32 %v1232, %v1204
        %v1261 = vmax.f32 %v1233, 0.0
        %v1262 = vmax.f32 %v1234, 0.0
        %v1263 = vmax.f32 %v1235, 0.0
        %v1264 = vmax.f32 %v1236, 0.0
        %v1265 = vmax.f32 %v1237, 0.0
        %v1266 = vmax.f32 %v1238, 0.0
        %v1267 = vmax.f32 %v1239, 0.0
        %v1268 = vmax.f32 %v1240, 0.0
        %v1269 = vmax.f32 %v1241, 0.0
        %v1270 = vmax.f32 %v1242, 0.0
        %v1271 = vmax.f32 %v1243, 0.0
        %v1272 = vmax.f32 %v1244, 0.0
        %v1273 = vmax.f32 %v1245, 0.0
        %v1274 = vmax.f32 %v1246, 0.0
        %v1275 = vmax.f32 %v1247, 0.0
        %v1276 = vmax.f32 %v1248, 0.0
        %v1277 = vmax.f32 %v1249, 0.0
        %v1278 = vmax.f32 %v1250, 0.0
        %v1279 = vmax.f32 %v1251, 0.0
        %v1280 = vmax.f32 %v1252, 0.0
        %v1281 = vmax.f32 %v1253, 0.0
        %v1282 = vmax.f32 %v1254, 0.0
        %v1283 = vmax.f32 %v1255, 0.0
        %v1284 = vmax.f32 %v1256, 0.0
        %v1285 = vmax.f32 %v1257, 0.0
        %v1286 = vmax.f32 %v1258, 0.0
        %v1287 = vmax.f32 %v1259, 0.0
        %v1288 = vmax.f32 %v1260, 0.0
        %1289 = vst [vmem:[%s232] sm:$0xff] %v1261
        %1290 = vst.msk [vmem:[%s232 + $0x8] sm:$0xff] %vm785, %v1262
        %1291 = vst [vmem:[%s232 + $0x10] sm:$0xff] %v1263
        %1292 = vst.msk [vmem:[%s232 + $0x18] sm:$0xff] %vm785, %v1264
        %1293 = vst [vmem:[%s232 + $0x20] sm:$0xff] %v1265
        %1294 = vst.msk [vmem:[%s232 + $0x28] sm:$0xff] %vm785, %v1266
        %1295 = vst [vmem:[%s232 + $0x30] sm:$0xff] %v1267
        %1296 = vst.msk [vmem:[%s232 + $0x38] sm:$0xff] %vm785, %v1268
        %1297 = vst [vmem:[%s232 + $0x40] sm:$0xff] %v1269
        %1298 = vst.msk [vmem:[%s232 + $0x48] sm:$0xff] %vm785, %v1270
        %1299 = vst [vmem:[%s232 + $0x50] sm:$0xff] %v1271
        %1300 = vst.msk [vmem:[%s232 + $0x58] sm:$0xff] %vm785, %v1272
        %1301 = vst [vmem:[%s232 + $0x60] sm:$0xff] %v1273
        %1302 = vst.msk [vmem:[%s232 + $0x68] sm:$0xff] %vm785, %v1274
        %1303 = vst [vmem:[%s232 + $0x70] sm:$0xff] %v1275
        %1304 = vst.msk [vmem:[%s232 + $0x78] sm:$0xff] %vm785, %v1276
        %1305 = vst [vmem:[%s232 + $0x80] sm:$0xff] %v1277
        %1306 = vst.msk [vmem:[%s232 + $0x88] sm:$0xff] %vm785, %v1278
        %1307 = vst [vmem:[%s232 + $0x90] sm:$0xff] %v1279
        %1308 = vst.msk [vmem:[%s232 + $0x98] sm:$0xff] %vm785, %v1280
        %1309 = vst [vmem:[%s232 + $0xa0] sm:$0xff] %v1281
        %1310 = vst.msk [vmem:[%s232 + $0xa8] sm:$0xff] %vm785, %v1282
        %1311 = vst [vmem:[%s232 + $0xb0] sm:$0xff] %v1283
        %1312 = vst.msk [vmem:[%s232 + $0xb8] sm:$0xff] %vm785, %v1284
        %1313 = vst [vmem:[%s232 + $0xc0] sm:$0xff] %v1285
        %1314 = vst.msk [vmem:[%s232 + $0xc8] sm:$0xff] %vm785, %v1286
        %1315 = vst [vmem:[%s232 + $0xd0] sm:$0xff] %v1287
        %1316 = vst.msk [vmem:[%s232 + $0xd8] sm:$0xff] %vm785, %v1288
        %v1317 = vsel %vm1000, %v842, 0.0
        %v1318 = vsel %vm1001, %v843, 0.0
        %v1319 = vsel %vm1002, %v844, 0.0
        %v1320 = vsel %vm1003, %v845, 0.0
        %v1321 = vsel %vm1004, %v846, 0.0
        %v1322 = vsel %vm1005, %v847, 0.0
        %v1323 = vsel %vm1006, %v848, 0.0
        %v1324 = vsel %vm1007, %v849, 0.0
        %v1325 = vsel %vm1008, %v850, 0.0
        %v1326 = vsel %vm1009, %v851, 0.0
        %v1327 = vsel %vm1010, %v852, 0.0
        %v1328 = vsel %vm1011, %v853, 0.0
        %v1329 = vsel %vm1012, %v854, 0.0
        %v1330 = vsel %vm1013, %v855, 0.0
        %v1331 = vsel %vm1032, %v1317, 0.0
        %v1332 = vsel %vm1032, %v1318, 0.0
        %v1333 = vadd.f32 %v1331, %v1332
        %v1334 = vsel %vm1032, %v1319, 0.0
        %v1335 = vadd.f32 %v1333, %v1334
        %v1336 = vsel %vm1032, %v1320, 0.0
        %v1337 = vadd.f32 %v1335, %v1336
        %v1338 = vsel %vm1032, %v1321, 0.0
        %v1339 = vadd.f32 %v1337, %v1338
        %v1340 = vsel %vm1032, %v1322, 0.0
        %v1341 = vadd.f32 %v1339, %v1340
        %v1342 = vsel %vm1032, %v1323, 0.0
        %v1343 = vadd.f32 %v1341, %v1342
        %v1344 = vsel %vm1032, %v1324, 0.0
        %v1345 = vadd.f32 %v1343, %v1344
        %v1346 = vsel %vm1032, %v1325, 0.0
        %v1347 = vadd.f32 %v1345, %v1346
        %v1348 = vsel %vm1032, %v1326, 0.0
        %v1349 = vadd.f32 %v1347, %v1348
        %v1350 = vsel %vm1032, %v1327, 0.0
        %v1351 = vadd.f32 %v1349, %v1350
        %v1352 = vsel %vm1032, %v1328, 0.0
        %v1353 = vadd.f32 %v1351, %v1352
        %v1354 = vsel %vm1032, %v1329, 0.0
        %v1355 = vadd.f32 %v1353, %v1354
        %v1356 = vsel %vm1032, %v1330, 0.0
        %v1357 = vadd.f32 %v1355, %v1356
        %v1358 = vrot.slane %v1357, 4
        %v1359 = vadd.f32 %v1357, %v1358
        %v1360 = vrot.slane %v1359, 2
        %v1361 = vadd.f32 %v1359, %v1360
        %v1362 = vrot.slane %v1361, 1
        %v1363 = vadd.f32 %v1361, %v1362
        %v1364 = vsel %vm1000, %v968, 0.0
        %v1365 = vsel %vm1001, %v969, 0.0
        %v1366 = vsel %vm1002, %v970, 0.0
        %v1367 = vsel %vm1003, %v971, 0.0
        %v1368 = vsel %vm1004, %v972, 0.0
        %v1369 = vsel %vm1005, %v973, 0.0
        %v1370 = vsel %vm1006, %v974, 0.0
        %v1371 = vsel %vm1007, %v975, 0.0
        %v1372 = vsel %vm1008, %v976, 0.0
        %v1373 = vsel %vm1009, %v977, 0.0
        %v1374 = vsel %vm1010, %v978, 0.0
        %v1375 = vsel %vm1011, %v979, 0.0
        %v1376 = vsel %vm1012, %v980, 0.0
        %v1377 = vsel %vm1013, %v981, 0.0
        %v1378 = vsel %vm1032, %v1364, 0.0
        %v1379 = vsel %vm1032, %v1365, 0.0
        %v1380 = vadd.f32 %v1378, %v1379
        %v1381 = vsel %vm1032, %v1366, 0.0
        %v1382 = vadd.f32 %v1380, %v1381
        %v1383 = vsel %vm1032, %v1367, 0.0
        %v1384 = vadd.f32 %v1382, %v1383
        %v1385 = vsel %vm1032, %v1368, 0.0
        %v1386 = vadd.f32 %v1384, %v1385
        %v1387 = vsel %vm1032, %v1369, 0.0
        %v1388 = vadd.f32 %v1386, %v1387
        %v1389 = vsel %vm1032, %v1370, 0.0
        %v1390 = vadd.f32 %v1388, %v1389
        %v1391 = vsel %vm1032, %v1371, 0.0
        %v1392 = vadd.f32 %v1390, %v1391
        %v1393 = vsel %vm1032, %v1372, 0.0
        %v1394 = vadd.f32 %v1392, %v1393
        %v1395 = vsel %vm1032, %v1373, 0.0
        %v1396 = vadd.f32 %v1394, %v1395
        %v1397 = vsel %vm1032, %v1374, 0.0
        %v1398 = vadd.f32 %v1396, %v1397
        %v1399 = vsel %vm1032, %v1375, 0.0
        %v1400 = vadd.f32 %v1398, %v1399
        %v1401 = vsel %vm1032, %v1376, 0.0
        %v1402 = vadd.f32 %v1400, %v1401
        %v1403 = vsel %vm1032, %v1377, 0.0
        %v1404 = vadd.f32 %v1402, %v1403
        %v1405 = vrot.slane %v1404, 4
        %v1406 = vadd.f32 %v1404, %v1405
        %v1407 = vrot.slane %v1406, 2
        %v1408 = vadd.f32 %v1406, %v1407
        %v1409 = vrot.slane %v1408, 1
        %v1410 = vadd.f32 %v1408, %v1409
        %vm1411 = vcmask 1040384
        %v1412 = vsel %vm1411, %v1363, %v1410
        %vm1413 = vcmask 910336
        %1414 = vst.msk [vmem:[%s215] sm:$0x3] %vm1413, %v1412
        %s1415 = smul.u32 14, %s19
        %p1416 = scmp.lt.s32.totalorder %s1415, 41
        %s1417 = scalar_select %p1416, %s1415, 41
        %s1418 = smul.addr %s1417, 2
        %s1419 = smul.addr %s1418, 8
        %s1420 = scalar_lea.vmem %s3, %s1419
        %s1421 = sand.u32 %s126, 1
        %s1422 = scalar_lea.sflag [#allocation3], %s1421
        %s1423 = sand.u32 %s126, 1
        %s1424 = smul.addr %s1423, 2
        %s1425 = scalar_lea.vmem [#allocation2], %s1424
        // Predicated region
        $region33: #{relu_conv_bn_relu.1} parent=31 // pred_check
          %p1426 = pneg %p110
        $region34: #{relu_conv_bn_relu.1} parent=31 // pred_check_branch
          %1428 = sbr.rel (%p1426) target = $region36
        $region35: #{relu_conv_bn_relu.1} parent=31 // pred_region
          %s1429 = smul.u32 14, %s19
        $region36: #{relu_conv_bn_relu.1} parent=31 // pred_fallthru
          _
        // Predicated region
        $region37: #{relu_conv_bn_relu.1} parent=31 // pred_check
          %p1430 = pneg %p136
        $region38: #{relu_conv_bn_relu.1} parent=31 // pred_check_branch
          %1432 = sbr.rel (%p1430) target = $region40
        $region39: #{relu_conv_bn_relu.1} parent=31 // pred_region
          %s1434 = ssub.s32 32, 32
          %1435 = vsyncadd %s1422, %s1434
          %s1436 = smul.addr %s19, 32
          %s1437 = scalar_lea.hbm %s4, %s1436
          %s1439 = sshll.u32 %s1425, 4
          %s1440 = int_to_ptr.vmem [resolvable:$true] %s1439
          %1442 = dma.vmem_to_hbm [thread:$0]  %s1440, 32, %s1437, %s1422
        $region40: #{relu_conv_bn_relu.1} parent=31 // pred_fallthru
          _
      $region32: #{relu_conv_bn_relu.1} parent=5 // pred_fallthru
        _
      %p1443 = scmp.le.s32.totalorder 2, %s14
      // Predicated region
      $region41: #{relu_conv_bn_relu.1} parent=5 // pred_check
        %p1444 = pneg %p1443
      $region42: #{relu_conv_bn_relu.1} parent=5 // pred_check_branch
        %1446 = sbr.rel (%p1444) target = $region44
      $region43: #{relu_conv_bn_relu.1} parent=5 // pred_region
        %s1447 = ssub.s32 %s14, 2
        // Predicated region
        $region45: #{relu_conv_bn_relu.1} parent=43 // pred_check
          %p1448 = pneg %p116
        $region46: #{relu_conv_bn_relu.1} parent=43 // pred_check_branch
          %1450 = sbr.rel (%p1448) target = $region48
        $region47: #{relu_conv_bn_relu.1} parent=43 // pred_region
          %s1451 = smul.u32 14, %s20
          %p1452 = scmp.lt.s32.totalorder %s1451, 41
          %s1453 = scalar_select %p1452, %s1451, 41
          %s1454 = smul.addr %s1453, 2
          %s1455 = smul.addr %s1454, 8
          %s1456 = scalar_lea.vmem %s3, %s1455
        $region48: #{relu_conv_bn_relu.1} parent=43 // pred_fallthru
          _
        // Predicated region
        $region49: #{relu_conv_bn_relu.1} parent=43 // pred_check
          %p1457 = pneg %p142
        $region50: #{relu_conv_bn_relu.1} parent=43 // pred_check_branch
          %1459 = sbr.rel (%p1457) target = $region52
        $region51: #{relu_conv_bn_relu.1} parent=43 // pred_region
          %s1460 = sand.u32 %s127, 1
          %s1461 = scalar_lea.sflag [#allocation3], %s1460
          %s1462 = sand.u32 %s127, 1
          %s1463 = smul.addr %s1462, 2
          %s1464 = scalar_lea.vmem [#allocation2], %s1463
          %1465 = dma.done %s1461, 32
        $region52: #{relu_conv_bn_relu.1} parent=43 // pred_fallthru
          _
      $region44: #{relu_conv_bn_relu.1} parent=5 // pred_fallthru
        _
    $region6: #{relu_conv_bn_relu.1} parent=1 // loop_footer
      %s18 = sadd.s32 1, %s14
    $region7: #{relu_conv_bn_relu.1} parent=1 // loop_footer_branch
      %13 = sbr.rel target = $region3
    $region8: #{relu_conv_bn_relu.1} parent=1 // loop_exit
      _
    %1466 = vsyncpa [#allocation3], 1
    %s1467 = scalar_lea.sflag [#allocation3], 1
    %1468 = vsyncpa %s1467, 1

</llo_original>
